<compile_context>
chip_gen: v7x
topology: tpu7x:2x2x1
jax: 0.10.0
libtpu: 0.0.40
codegen_flags: <defaults>
</compile_context>

<pallas_src>
import math

import jax
import jax.numpy as jnp
from jax.experimental import pallas as pl
from jax.experimental.pallas import tpu as pltpu
from jax.scipy.special import erf as _erf_exact  # wrapper time-branch + reference only

TIME_EMB_DIM = 128
POINT_FEAT_DIM = 128
HIDDEN_DIM = 256
LN_EPS = 1e-5
_INV_SQRT2 = 1.0 / math.sqrt(2.0)
_SQRT_2_OVER_PI = math.sqrt(2.0 / math.pi)

# weights that feed the MXU (cast to bf16 once in the wrapper)
_BF16_WEIGHTS = ("pw2", "pw3", "sw1", "sw2", "sw3")


# ----------------------------- in-kernel math helpers -----------------------------

def _gelu_tanh(x):
    # tanh-approximation GELU: tanh goes to the EUP (free bundle slot), keeping the
    # VPU free for bias adds / LayerNorm.  |err| vs exact erf GELU < ~3e-3.
    return 0.5 * x * (1.0 + jnp.tanh(_SQRT_2_OVER_PI * (x + 0.044715 * x * x * x)))


def _layernorm(x, gamma, beta):
    mu = jnp.mean(x, axis=-1, keepdims=True)
    var = jnp.mean(jnp.square(x - mu), axis=-1, keepdims=True)
    return (x - mu) * jax.lax.rsqrt(var + LN_EPS) * gamma + beta


def _mm(a_f32, w_ref):
    # bf16 x bf16 -> f32 accumulation on the MXU.
    return jnp.dot(a_f32.astype(jnp.bfloat16), w_ref[...],
                   preferred_element_type=jnp.float32)


# ----------------------------------- kernel ---------------------------------------

def score_kernel(t_emb_ref, x_ref,
                 pw1_ref, pb1_ref, pw2_ref, pb2_ref, pw3_ref, pb3_ref,
                 pg_ref, pbeta_ref,
                 sw1_ref, sb1_ref, sw2_ref, sb2_ref, sw3_ref, sb3_ref,
                 o_ref):
    x = x_ref[...]                                                    # (TN, 3) f32
    w1 = pw1_ref[...]                                                 # (3, 128) f32

    # Linear(3 -> 128) on the VPU: K=3 would waste a full MXU weight-load pass.
    h = (x[:, 0:1] * w1[0:1, :]
         + x[:, 1:2] * w1[1:2, :]
         + x[:, 2:3] * w1[2:3, :]
         + pb1_ref[...])                                              # (TN, 128)
    h = _gelu_tanh(h)

    # point_mlp (bf16 matmuls, f32 elementwise)
    h = _gelu_tanh(_mm(h, pw2_ref) + pb2_ref[...])                    # (TN, 256)
    h = _mm(h, pw3_ref) + pb3_ref[...]                                # (TN, 256)
    h = _gelu_tanh(_layernorm(h, pg_ref[...], pbeta_ref[...]))

    # x_feat + t_emb (t_emb row broadcast over all points in the tile)
    h = h + t_emb_ref[...]

    # score_head
    h = _gelu_tanh(_mm(h, sw1_ref) + sb1_ref[...])
    h = _gelu_tanh(_mm(h, sw2_ref) + sb2_ref[...])
    o_ref[...] = _mm(h, sw3_ref) + sb3_ref[...]                       # (TN, 3)


# ----------------------------------- wrapper ---------------------------------------

def _gelu_exact(x):
    return 0.5 * x * (1.0 + _erf_exact(x * _INV_SQRT2))


def _ln(x, g, b):
    mu = jnp.mean(x, axis=-1, keepdims=True)
    var = jnp.mean(jnp.square(x - mu), axis=-1, keepdims=True)
    return (x - mu) * jax.lax.rsqrt(var + LN_EPS) * g + b


def _time_embedding(params, t):
    # Sinusoidal embedding + time MLP in plain JAX: a single-row GEMV is not worth a
    # separate kernel launch + HBM round-trip of a 1 KB row.
    t_arr = jnp.asarray(t, jnp.float32).reshape(1)
    half = TIME_EMB_DIM // 2
    factor = math.log(10000.0) / (half - 1)
    freqs = jnp.exp(jnp.arange(half, dtype=jnp.float32) * -factor)
    arg = t_arr[:, None] * freqs[None, :]
    emb = jnp.concatenate([jnp.sin(arg), jnp.cos(arg)], axis=-1)      # (1, 128)
    h = _gelu_exact(emb @ params["tw1"] + params["tb1"])
    h = h @ params["tw2"] + params["tb2"]
    return _gelu_exact(_ln(h, params["tg"], params["tbeta"]))         # (1, 256)


def scorenet_forward(params, x, t, *, tile_n=512):
    t_emb = _time_embedding(params, t)                                # (1, 256) f32

    n = x.shape[0]
    # Shrink the tile for small point clouds (block second-to-last dim must be a
    # multiple of 8).  For large N, tile_n=512 keeps the grid >= 2 tiles so both
    # v7x TensorCores get work, while activations stay ~2 MB of VMEM.
    tile = min(tile_n, pl.cdiv(n, 8) * 8)
    tile = max(8, tile)
    n_pad = pl.cdiv(n, tile) * tile
    x_p = jnp.pad(x.astype(jnp.float32), ((0, n_pad - n), (0, 0)))
    grid = (n_pad // tile,)

    # Cast MXU-bound weights to bf16 once; keep pw1 / biases / LN params in f32
    # (they are used on the VPU only).
    kparams = dict(params)
    for k in _BF16_WEIGHTS:
        kparams[k] = params[k].astype(jnp.bfloat16)

    def full(shape):
        return pl.BlockSpec(shape, lambda i: (0,) * len(shape))

    weight_order = ["pw1", "pb1", "pw2", "pb2", "pw3", "pb3", "pg", "pbeta",
                    "sw1", "sb1", "sw2", "sb2", "sw3", "sb3"]

    in_specs = [
        full((1, HIDDEN_DIM)),                          # t_emb (resident)
        pl.BlockSpec((tile, 3), lambda i: (i, 0)),      # x tile
    ] + [full(kparams[k].shape) for k in weight_order]  # resident weights

    out = pl.pallas_call(
        score_kernel,
        grid=grid,
        in_specs=in_specs,
        out_specs=pl.BlockSpec((tile, 3), lambda i: (i, 0)),
        out_shape=jax.ShapeDtypeStruct((n_pad, 3), jnp.float32),
        compiler_params=pltpu.CompilerParams(dimension_semantics=("parallel",)),
    )(t_emb, x_p, *[kparams[k] for k in weight_order])

    return out[:n]


# -------------------------- deterministic parameter init ---------------------------

def init_params(key):
    ks = jax.random.split(key, 8)

    def linear(k, fan_in, fan_out):
        # matches torch.nn.Linear default init: U(-1/sqrt(fan_in), 1/sqrt(fan_in))
        bound = 1.0 / math.sqrt(fan_in)
        kw, kb = jax.random.split(k)
        w = jax.random.uniform(kw, (fan_in, fan_out), jnp.float32, -bound, bound)
        b = jax.random.uniform(kb, (1, fan_out), jnp.float32, -bound, bound)
        return w, b

    p = {}
    # time_mlp: Linear(128,256), Linear(256,256), LayerNorm(256)
    p["tw1"], p["tb1"] = linear(ks[0], TIME_EMB_DIM, HIDDEN_DIM)
    p["tw2"], p["tb2"] = linear(ks[1], HIDDEN_DIM, HIDDEN_DIM)
    p["tg"] = jnp.ones((1, HIDDEN_DIM), jnp.float32)
    p["tbeta"] = jnp.zeros((1, HIDDEN_DIM), jnp.float32)
    # point_mlp: Linear(3,128), Linear(128,256), Linear(256,256), LayerNorm(256)
    p["pw1"], p["pb1"] = linear(ks[2], 3, POINT_FEAT_DIM)
    p["pw2"], p["pb2"] = linear(ks[3], POINT_FEAT_DIM, HIDDEN_DIM)
    p["pw3"], p["pb3"] = linear(ks[4], HIDDEN_DIM, HIDDEN_DIM)
    p["pg"] = jnp.ones((1, HIDDEN_DIM), jnp.float32)
    p["pbeta"] = jnp.zeros((1, HIDDEN_DIM), jnp.float32)
    # score_head: Linear(256,256), Linear(256,256), Linear(256,3)
    p["sw1"], p["sb1"] = linear(ks[5], HIDDEN_DIM, HIDDEN_DIM)
    p["sw2"], p["sb2"] = linear(ks[6], HIDDEN_DIM, HIDDEN_DIM)
    p["sw3"], p["sb3"] = linear(ks[7], HIDDEN_DIM, 3)
    return p


# ------------------------------- plain-JAX reference -------------------------------

def reference_forward(p, x, t):
    t_emb = _time_embedding(p, t)
    h = _gelu_exact(x @ p["pw1"] + p["pb1"])
    h = _gelu_exact(h @ p["pw2"] + p["pb2"])
    h = h @ p["pw3"] + p["pb3"]
    x_feat = _gelu_exact(_ln(h, p["pg"], p["pbeta"]))
    h = x_feat + t_emb
    h = _gelu_exact(h @ p["sw1"] + p["sb1"])
    h = _gelu_exact(h @ p["sw2"] + p["sb2"])
    return h @ p["sw3"] + p["sb3"]


# -------------------------------------- main ---------------------------------------

if __name__ == "__main__":
    key = jax.random.PRNGKey(0)
    pkey, xkey = jax.random.split(key)
    params = init_params(pkey)

    N = 16                      # small point cloud, x: (N, 3)
    x = jax.random.normal(xkey, (N, 3), jnp.float32)
    t = 0.37                    # scalar diffusion time

    score = scorenet_forward(params, x, t)
    score = jax.block_until_ready(score)

    ref = reference_forward(params, x, t)
    assert score.shape == (N, 3)
    # bf16 matmul operands + tanh GELU vs exact erf/f32 reference: a few e-3 abs error.
    assert jnp.allclose(score, ref, atol=3e-2, rtol=3e-2), (
        f"max abs err {jnp.max(jnp.abs(score - ref))}")

    print("KERNEL_OK")
</pallas_src>

<mosaic_0001>
module attributes {stable_mosaic.version = 11 : i64} {
  func.func @score_kernel(%arg0: i32, %arg1: memref<1x256xf32, #tpu.memory_space<vmem>>, %arg2: memref<16x3xf32, #tpu.memory_space<vmem>>, %arg3: memref<3x128xf32, #tpu.memory_space<vmem>>, %arg4: memref<1x128xf32, #tpu.memory_space<vmem>>, %arg5: memref<128x256xbf16, #tpu.memory_space<vmem>>, %arg6: memref<1x256xf32, #tpu.memory_space<vmem>>, %arg7: memref<256x256xbf16, #tpu.memory_space<vmem>>, %arg8: memref<1x256xf32, #tpu.memory_space<vmem>>, %arg9: memref<1x256xf32, #tpu.memory_space<vmem>>, %arg10: memref<1x256xf32, #tpu.memory_space<vmem>>, %arg11: memref<256x256xbf16, #tpu.memory_space<vmem>>, %arg12: memref<1x256xf32, #tpu.memory_space<vmem>>, %arg13: memref<256x256xbf16, #tpu.memory_space<vmem>>, %arg14: memref<1x256xf32, #tpu.memory_space<vmem>>, %arg15: memref<256x3xbf16, #tpu.memory_space<vmem>>, %arg16: memref<1x3xf32, #tpu.memory_space<vmem>>, %arg17: memref<16x3xf32, #tpu.memory_space<vmem>>) attributes {dimension_semantics = [#tpu.dimension_semantics<parallel>], iteration_bounds = array<i64: 1>, scalar_prefetch = 0 : i64, scratch_operands = 0 : i64, tpu.core_type = #tpu.core_type<tc>, window_params = [{pipeline_mode = #tpu.pipeline_mode<synchronous>, transform_indices = @transform_0, window_bounds = array<i64: 1, 256>}, {transform_indices = @transform_1, window_bounds = array<i64: 16, 3>}, {pipeline_mode = #tpu.pipeline_mode<synchronous>, transform_indices = @transform_2, window_bounds = array<i64: 3, 128>}, {pipeline_mode = #tpu.pipeline_mode<synchronous>, transform_indices = @transform_3, window_bounds = array<i64: 1, 128>}, {pipeline_mode = #tpu.pipeline_mode<synchronous>, transform_indices = @transform_4, window_bounds = array<i64: 128, 256>}, {pipeline_mode = #tpu.pipeline_mode<synchronous>, transform_indices = @transform_5, window_bounds = array<i64: 1, 256>}, {pipeline_mode = #tpu.pipeline_mode<synchronous>, transform_indices = @transform_6, window_bounds = array<i64: 256, 256>}, {pipeline_mode = #tpu.pipeline_mode<synchronous>, transform_indices = @transform_7, window_bounds = array<i64: 1, 256>}, {pipeline_mode = #tpu.pipeline_mode<synchronous>, transform_indices = @transform_8, window_bounds = array<i64: 1, 256>}, {pipeline_mode = #tpu.pipeline_mode<synchronous>, transform_indices = @transform_9, window_bounds = array<i64: 1, 256>}, {pipeline_mode = #tpu.pipeline_mode<synchronous>, transform_indices = @transform_10, window_bounds = array<i64: 256, 256>}, {pipeline_mode = #tpu.pipeline_mode<synchronous>, transform_indices = @transform_11, window_bounds = array<i64: 1, 256>}, {pipeline_mode = #tpu.pipeline_mode<synchronous>, transform_indices = @transform_12, window_bounds = array<i64: 256, 256>}, {pipeline_mode = #tpu.pipeline_mode<synchronous>, transform_indices = @transform_13, window_bounds = array<i64: 1, 256>}, {pipeline_mode = #tpu.pipeline_mode<synchronous>, transform_indices = @transform_14, window_bounds = array<i64: 256, 3>}, {pipeline_mode = #tpu.pipeline_mode<synchronous>, transform_indices = @transform_15, window_bounds = array<i64: 1, 3>}, {transform_indices = @transform_16, window_bounds = array<i64: 16, 3>}]} {
    %c0 = arith.constant 0 : index
    %c0_0 = arith.constant 0 : index
    %0 = vector.load %arg2[%c0, %c0_0] : memref<16x3xf32, #tpu.memory_space<vmem>>, vector<16x3xf32>
    %c0_1 = arith.constant 0 : index
    %c0_2 = arith.constant 0 : index
    %1 = vector.load %arg3[%c0_1, %c0_2] : memref<3x128xf32, #tpu.memory_space<vmem>>, vector<3x128xf32>
    %2 = vector.extract_strided_slice %0 {offsets = [0, 0], sizes = [16, 1], strides = [1, 1]} : vector<16x3xf32> to vector<16x1xf32>
    %3 = vector.extract_strided_slice %1 {offsets = [0, 0], sizes = [1, 128], strides = [1, 1]} : vector<3x128xf32> to vector<1x128xf32>
    %4 = vector.broadcast %2 : vector<16x1xf32> to vector<16x128xf32>
    %5 = vector.broadcast %3 : vector<1x128xf32> to vector<16x128xf32>
    %6 = arith.mulf %4, %5 : vector<16x128xf32>
    %7 = vector.extract_strided_slice %0 {offsets = [0, 1], sizes = [16, 1], strides = [1, 1]} : vector<16x3xf32> to vector<16x1xf32>
    %8 = vector.extract_strided_slice %1 {offsets = [1, 0], sizes = [1, 128], strides = [1, 1]} : vector<3x128xf32> to vector<1x128xf32>
    %9 = vector.broadcast %7 : vector<16x1xf32> to vector<16x128xf32>
    %10 = vector.broadcast %8 : vector<1x128xf32> to vector<16x128xf32>
    %11 = arith.mulf %9, %10 : vector<16x128xf32>
    %12 = arith.addf %6, %11 : vector<16x128xf32>
    %13 = vector.extract_strided_slice %0 {offsets = [0, 2], sizes = [16, 1], strides = [1, 1]} : vector<16x3xf32> to vector<16x1xf32>
    %14 = vector.extract_strided_slice %1 {offsets = [2, 0], sizes = [1, 128], strides = [1, 1]} : vector<3x128xf32> to vector<1x128xf32>
    %15 = vector.broadcast %13 : vector<16x1xf32> to vector<16x128xf32>
    %16 = vector.broadcast %14 : vector<1x128xf32> to vector<16x128xf32>
    %17 = arith.mulf %15, %16 : vector<16x128xf32>
    %18 = arith.addf %12, %17 : vector<16x128xf32>
    %c0_3 = arith.constant 0 : index
    %c0_4 = arith.constant 0 : index
    %19 = vector.load %arg4[%c0_3, %c0_4] : memref<1x128xf32, #tpu.memory_space<vmem>>, vector<1x128xf32>
    %20 = vector.broadcast %19 : vector<1x128xf32> to vector<16x128xf32>
    %21 = arith.addf %18, %20 : vector<16x128xf32>
    %cst = arith.constant 5.000000e-01 : f32
    %22 = vector.broadcast %cst : f32 to vector<16x128xf32>
    %23 = arith.mulf %22, %21 : vector<16x128xf32>
    %cst_5 = arith.constant 4.471500e-02 : f32
    %24 = vector.broadcast %cst_5 : f32 to vector<16x128xf32>
    %25 = arith.mulf %24, %21 : vector<16x128xf32>
    %26 = arith.mulf %25, %21 : vector<16x128xf32>
    %27 = arith.mulf %26, %21 : vector<16x128xf32>
    %28 = arith.addf %21, %27 : vector<16x128xf32>
    %cst_6 = arith.constant 0.797884583 : f32
    %29 = vector.broadcast %cst_6 : f32 to vector<16x128xf32>
    %30 = arith.mulf %29, %28 : vector<16x128xf32>
    %31 = math.tanh %30 : vector<16x128xf32>
    %cst_7 = arith.constant 1.000000e+00 : f32
    %32 = vector.broadcast %cst_7 : f32 to vector<16x128xf32>
    %33 = arith.addf %32, %31 : vector<16x128xf32>
    %34 = arith.mulf %23, %33 : vector<16x128xf32>
    %35 = arith.truncf %34 : vector<16x128xf32> to vector<16x128xbf16>
    %c0_8 = arith.constant 0 : index
    %c0_9 = arith.constant 0 : index
    %36 = vector.load %arg5[%c0_8, %c0_9] : memref<128x256xbf16, #tpu.memory_space<vmem>>, vector<128x256xbf16>
    %cst_10 = arith.constant dense<0.000000e+00> : vector<16x256xf32>
    %37 = tpu.matmul %35, %36, %cst_10 {dimension_numbers = #tpu.dot_dimension_numbers<[1], [0], [0], [1], [0, 0, 1, 1], [], []>} : vector<16x128xbf16>, vector<128x256xbf16>, vector<16x256xf32> -> vector<16x256xf32>
    %c0_11 = arith.constant 0 : index
    %c0_12 = arith.constant 0 : index
    %38 = vector.load %arg6[%c0_11, %c0_12] : memref<1x256xf32, #tpu.memory_space<vmem>>, vector<1x256xf32>
    %39 = vector.broadcast %38 : vector<1x256xf32> to vector<16x256xf32>
    %40 = arith.addf %37, %39 : vector<16x256xf32>
    %cst_13 = arith.constant 5.000000e-01 : f32
    %41 = vector.broadcast %cst_13 : f32 to vector<16x256xf32>
    %42 = arith.mulf %41, %40 : vector<16x256xf32>
    %cst_14 = arith.constant 4.471500e-02 : f32
    %43 = vector.broadcast %cst_14 : f32 to vector<16x256xf32>
    %44 = arith.mulf %43, %40 : vector<16x256xf32>
    %45 = arith.mulf %44, %40 : vector<16x256xf32>
    %46 = arith.mulf %45, %40 : vector<16x256xf32>
    %47 = arith.addf %40, %46 : vector<16x256xf32>
    %cst_15 = arith.constant 0.797884583 : f32
    %48 = vector.broadcast %cst_15 : f32 to vector<16x256xf32>
    %49 = arith.mulf %48, %47 : vector<16x256xf32>
    %50 = math.tanh %49 : vector<16x256xf32>
    %cst_16 = arith.constant 1.000000e+00 : f32
    %51 = vector.broadcast %cst_16 : f32 to vector<16x256xf32>
    %52 = arith.addf %51, %50 : vector<16x256xf32>
    %53 = arith.mulf %42, %52 : vector<16x256xf32>
    %54 = arith.truncf %53 : vector<16x256xf32> to vector<16x256xbf16>
    %c0_17 = arith.constant 0 : index
    %c0_18 = arith.constant 0 : index
    %55 = vector.load %arg7[%c0_17, %c0_18] : memref<256x256xbf16, #tpu.memory_space<vmem>>, vector<256x256xbf16>
    %cst_19 = arith.constant dense<0.000000e+00> : vector<16x256xf32>
    %56 = tpu.matmul %54, %55, %cst_19 {dimension_numbers = #tpu.dot_dimension_numbers<[1], [0], [0], [1], [0, 0, 1, 1], [], []>} : vector<16x256xbf16>, vector<256x256xbf16>, vector<16x256xf32> -> vector<16x256xf32>
    %c0_20 = arith.constant 0 : index
    %c0_21 = arith.constant 0 : index
    %57 = vector.load %arg8[%c0_20, %c0_21] : memref<1x256xf32, #tpu.memory_space<vmem>>, vector<1x256xf32>
    %58 = vector.broadcast %57 : vector<1x256xf32> to vector<16x256xf32>
    %59 = arith.addf %56, %58 : vector<16x256xf32>
    %c0_22 = arith.constant 0 : index
    %c0_23 = arith.constant 0 : index
    %60 = vector.load %arg9[%c0_22, %c0_23] : memref<1x256xf32, #tpu.memory_space<vmem>>, vector<1x256xf32>
    %c0_24 = arith.constant 0 : index
    %c0_25 = arith.constant 0 : index
    %61 = vector.load %arg10[%c0_24, %c0_25] : memref<1x256xf32, #tpu.memory_space<vmem>>, vector<1x256xf32>
    %cst_26 = arith.constant dense<0.000000e+00> : vector<16xf32>
    %62 = vector.multi_reduction <add>, %59, %cst_26 [1] : vector<16x256xf32> to vector<16xf32>
    %63 = vector.shape_cast %62 : vector<16xf32> to vector<16x1xf32>
    %cst_27 = arith.constant 2.560000e+02 : f32
    %64 = vector.broadcast %cst_27 : f32 to vector<16x1xf32>
    %65 = arith.divf %63, %64 : vector<16x1xf32>
    %66 = vector.broadcast %65 : vector<16x1xf32> to vector<16x256xf32>
    %67 = arith.subf %59, %66 : vector<16x256xf32>
    %68 = arith.mulf %67, %67 : vector<16x256xf32>
    %cst_28 = arith.constant dense<0.000000e+00> : vector<16xf32>
    %69 = vector.multi_reduction <add>, %68, %cst_28 [1] : vector<16x256xf32> to vector<16xf32>
    %70 = vector.shape_cast %69 : vector<16xf32> to vector<16x1xf32>
    %cst_29 = arith.constant 2.560000e+02 : f32
    %71 = vector.broadcast %cst_29 : f32 to vector<16x1xf32>
    %72 = arith.divf %70, %71 : vector<16x1xf32>
    %73 = vector.broadcast %65 : vector<16x1xf32> to vector<16x256xf32>
    %74 = arith.subf %59, %73 : vector<16x256xf32>
    %cst_30 = arith.constant 9.99999974E-6 : f32
    %75 = vector.broadcast %cst_30 : f32 to vector<16x1xf32>
    %76 = arith.addf %72, %75 : vector<16x1xf32>
    %77 = math.rsqrt %76 : vector<16x1xf32>
    %78 = vector.broadcast %77 : vector<16x1xf32> to vector<16x256xf32>
    %79 = arith.mulf %74, %78 : vector<16x256xf32>
    %80 = vector.broadcast %60 : vector<1x256xf32> to vector<16x256xf32>
    %81 = arith.mulf %79, %80 : vector<16x256xf32>
    %82 = vector.broadcast %61 : vector<1x256xf32> to vector<16x256xf32>
    %83 = arith.addf %81, %82 : vector<16x256xf32>
    %cst_31 = arith.constant 5.000000e-01 : f32
    %84 = vector.broadcast %cst_31 : f32 to vector<16x256xf32>
    %85 = arith.mulf %84, %83 : vector<16x256xf32>
    %cst_32 = arith.constant 4.471500e-02 : f32
    %86 = vector.broadcast %cst_32 : f32 to vector<16x256xf32>
    %87 = arith.mulf %86, %83 : vector<16x256xf32>
    %88 = arith.mulf %87, %83 : vector<16x256xf32>
    %89 = arith.mulf %88, %83 : vector<16x256xf32>
    %90 = arith.addf %83, %89 : vector<16x256xf32>
    %cst_33 = arith.constant 0.797884583 : f32
    %91 = vector.broadcast %cst_33 : f32 to vector<16x256xf32>
    %92 = arith.mulf %91, %90 : vector<16x256xf32>
    %93 = math.tanh %92 : vector<16x256xf32>
    %cst_34 = arith.constant 1.000000e+00 : f32
    %94 = vector.broadcast %cst_34 : f32 to vector<16x256xf32>
    %95 = arith.addf %94, %93 : vector<16x256xf32>
    %96 = arith.mulf %85, %95 : vector<16x256xf32>
    %c0_35 = arith.constant 0 : index
    %c0_36 = arith.constant 0 : index
    %97 = vector.load %arg1[%c0_35, %c0_36] : memref<1x256xf32, #tpu.memory_space<vmem>>, vector<1x256xf32>
    %98 = vector.broadcast %97 : vector<1x256xf32> to vector<16x256xf32>
    %99 = arith.addf %96, %98 : vector<16x256xf32>
    %100 = arith.truncf %99 : vector<16x256xf32> to vector<16x256xbf16>
    %c0_37 = arith.constant 0 : index
    %c0_38 = arith.constant 0 : index
    %101 = vector.load %arg11[%c0_37, %c0_38] : memref<256x256xbf16, #tpu.memory_space<vmem>>, vector<256x256xbf16>
    %cst_39 = arith.constant dense<0.000000e+00> : vector<16x256xf32>
    %102 = tpu.matmul %100, %101, %cst_39 {dimension_numbers = #tpu.dot_dimension_numbers<[1], [0], [0], [1], [0, 0, 1, 1], [], []>} : vector<16x256xbf16>, vector<256x256xbf16>, vector<16x256xf32> -> vector<16x256xf32>
    %c0_40 = arith.constant 0 : index
    %c0_41 = arith.constant 0 : index
    %103 = vector.load %arg12[%c0_40, %c0_41] : memref<1x256xf32, #tpu.memory_space<vmem>>, vector<1x256xf32>
    %104 = vector.broadcast %103 : vector<1x256xf32> to vector<16x256xf32>
    %105 = arith.addf %102, %104 : vector<16x256xf32>
    %cst_42 = arith.constant 5.000000e-01 : f32
    %106 = vector.broadcast %cst_42 : f32 to vector<16x256xf32>
    %107 = arith.mulf %106, %105 : vector<16x256xf32>
    %cst_43 = arith.constant 4.471500e-02 : f32
    %108 = vector.broadcast %cst_43 : f32 to vector<16x256xf32>
    %109 = arith.mulf %108, %105 : vector<16x256xf32>
    %110 = arith.mulf %109, %105 : vector<16x256xf32>
    %111 = arith.mulf %110, %105 : vector<16x256xf32>
    %112 = arith.addf %105, %111 : vector<16x256xf32>
    %cst_44 = arith.constant 0.797884583 : f32
    %113 = vector.broadcast %cst_44 : f32 to vector<16x256xf32>
    %114 = arith.mulf %113, %112 : vector<16x256xf32>
    %115 = math.tanh %114 : vector<16x256xf32>
    %cst_45 = arith.constant 1.000000e+00 : f32
    %116 = vector.broadcast %cst_45 : f32 to vector<16x256xf32>
    %117 = arith.addf %116, %115 : vector<16x256xf32>
    %118 = arith.mulf %107, %117 : vector<16x256xf32>
    %119 = arith.truncf %118 : vector<16x256xf32> to vector<16x256xbf16>
    %c0_46 = arith.constant 0 : index
    %c0_47 = arith.constant 0 : index
    %120 = vector.load %arg13[%c0_46, %c0_47] : memref<256x256xbf16, #tpu.memory_space<vmem>>, vector<256x256xbf16>
    %cst_48 = arith.constant dense<0.000000e+00> : vector<16x256xf32>
    %121 = tpu.matmul %119, %120, %cst_48 {dimension_numbers = #tpu.dot_dimension_numbers<[1], [0], [0], [1], [0, 0, 1, 1], [], []>} : vector<16x256xbf16>, vector<256x256xbf16>, vector<16x256xf32> -> vector<16x256xf32>
    %c0_49 = arith.constant 0 : index
    %c0_50 = arith.constant 0 : index
    %122 = vector.load %arg14[%c0_49, %c0_50] : memref<1x256xf32, #tpu.memory_space<vmem>>, vector<1x256xf32>
    %123 = vector.broadcast %122 : vector<1x256xf32> to vector<16x256xf32>
    %124 = arith.addf %121, %123 : vector<16x256xf32>
    %cst_51 = arith.constant 5.000000e-01 : f32
    %125 = vector.broadcast %cst_51 : f32 to vector<16x256xf32>
    %126 = arith.mulf %125, %124 : vector<16x256xf32>
    %cst_52 = arith.constant 4.471500e-02 : f32
    %127 = vector.broadcast %cst_52 : f32 to vector<16x256xf32>
    %128 = arith.mulf %127, %124 : vector<16x256xf32>
    %129 = arith.mulf %128, %124 : vector<16x256xf32>
    %130 = arith.mulf %129, %124 : vector<16x256xf32>
    %131 = arith.addf %124, %130 : vector<16x256xf32>
    %cst_53 = arith.constant 0.797884583 : f32
    %132 = vector.broadcast %cst_53 : f32 to vector<16x256xf32>
    %133 = arith.mulf %132, %131 : vector<16x256xf32>
    %134 = math.tanh %133 : vector<16x256xf32>
    %cst_54 = arith.constant 1.000000e+00 : f32
    %135 = vector.broadcast %cst_54 : f32 to vector<16x256xf32>
    %136 = arith.addf %135, %134 : vector<16x256xf32>
    %137 = arith.mulf %126, %136 : vector<16x256xf32>
    %138 = arith.truncf %137 : vector<16x256xf32> to vector<16x256xbf16>
    %c0_55 = arith.constant 0 : index
    %c0_56 = arith.constant 0 : index
    %139 = vector.load %arg15[%c0_55, %c0_56] : memref<256x3xbf16, #tpu.memory_space<vmem>>, vector<256x3xbf16>
    %cst_57 = arith.constant dense<0.000000e+00> : vector<16x3xf32>
    %140 = tpu.matmul %138, %139, %cst_57 {dimension_numbers = #tpu.dot_dimension_numbers<[1], [0], [0], [1], [0, 0, 1, 1], [], []>} : vector<16x256xbf16>, vector<256x3xbf16>, vector<16x3xf32> -> vector<16x3xf32>
    %c0_58 = arith.constant 0 : index
    %c0_59 = arith.constant 0 : index
    %141 = vector.load %arg16[%c0_58, %c0_59] : memref<1x3xf32, #tpu.memory_space<vmem>>, vector<1x3xf32>
    %142 = vector.broadcast %141 : vector<1x3xf32> to vector<16x3xf32>
    %143 = arith.addf %140, %142 : vector<16x3xf32>
    %c0_60 = arith.constant 0 : index
    %c0_61 = arith.constant 0 : index
    %144 = vector.load %arg17[%c0_60, %c0_61] : memref<16x3xf32, #tpu.memory_space<vmem>>, vector<16x3xf32>
    tpu.vector_store %arg17[%c0_60, %c0_61], %143 {strides = array<i32>} : memref<16x3xf32, #tpu.memory_space<vmem>>, vector<16x3xf32>,
    return
  }
  func.func @transform_0(%arg0: i32) -> (i32, i32) {
    %c0_i32 = arith.constant 0 : i32
    %c0_i32_0 = arith.constant 0 : i32
    %c0_i32_1 = arith.constant 0 : i32
    return %c0_i32, %c0_i32_0 : i32, i32
  }
  func.func @transform_1(%arg0: i32) -> (i32, i32) {
    %c0_i32 = arith.constant 0 : i32
    %c0_i32_0 = arith.constant 0 : i32
    return %arg0, %c0_i32 : i32, i32
  }
  func.func @transform_2(%arg0: i32) -> (i32, i32) {
    %c0_i32 = arith.constant 0 : i32
    %c0_i32_0 = arith.constant 0 : i32
    %c0_i32_1 = arith.constant 0 : i32
    return %c0_i32, %c0_i32_0 : i32, i32
  }
  func.func @transform_3(%arg0: i32) -> (i32, i32) {
    %c0_i32 = arith.constant 0 : i32
    %c0_i32_0 = arith.constant 0 : i32
    %c0_i32_1 = arith.constant 0 : i32
    return %c0_i32, %c0_i32_0 : i32, i32
  }
  func.func @transform_4(%arg0: i32) -> (i32, i32) {
    %c0_i32 = arith.constant 0 : i32
    %c0_i32_0 = arith.constant 0 : i32
    %c0_i32_1 = arith.constant 0 : i32
    return %c0_i32, %c0_i32_0 : i32, i32
  }
  func.func @transform_5(%arg0: i32) -> (i32, i32) {
    %c0_i32 = arith.constant 0 : i32
    %c0_i32_0 = arith.constant 0 : i32
    %c0_i32_1 = arith.constant 0 : i32
    return %c0_i32, %c0_i32_0 : i32, i32
  }
  func.func @transform_6(%arg0: i32) -> (i32, i32) {
    %c0_i32 = arith.constant 0 : i32
    %c0_i32_0 = arith.constant 0 : i32
    %c0_i32_1 = arith.constant 0 : i32
    return %c0_i32, %c0_i32_0 : i32, i32
  }
  func.func @transform_7(%arg0: i32) -> (i32, i32) {
    %c0_i32 = arith.constant 0 : i32
    %c0_i32_0 = arith.constant 0 : i32
    %c0_i32_1 = arith.constant 0 : i32
    return %c0_i32, %c0_i32_0 : i32, i32
  }
  func.func @transform_8(%arg0: i32) -> (i32, i32) {
    %c0_i32 = arith.constant 0 : i32
    %c0_i32_0 = arith.constant 0 : i32
    %c0_i32_1 = arith.constant 0 : i32
    return %c0_i32, %c0_i32_0 : i32, i32
  }
  func.func @transform_9(%arg0: i32) -> (i32, i32) {
    %c0_i32 = arith.constant 0 : i32
    %c0_i32_0 = arith.constant 0 : i32
    %c0_i32_1 = arith.constant 0 : i32
    return %c0_i32, %c0_i32_0 : i32, i32
  }
  func.func @transform_10(%arg0: i32) -> (i32, i32) {
    %c0_i32 = arith.constant 0 : i32
    %c0_i32_0 = arith.constant 0 : i32
    %c0_i32_1 = arith.constant 0 : i32
    return %c0_i32, %c0_i32_0 : i32, i32
  }
  func.func @transform_11(%arg0: i32) -> (i32, i32) {
    %c0_i32 = arith.constant 0 : i32
    %c0_i32_0 = arith.constant 0 : i32
    %c0_i32_1 = arith.constant 0 : i32
    return %c0_i32, %c0_i32_0 : i32, i32
  }
  func.func @transform_12(%arg0: i32) -> (i32, i32) {
    %c0_i32 = arith.constant 0 : i32
    %c0_i32_0 = arith.constant 0 : i32
    %c0_i32_1 = arith.constant 0 : i32
    return %c0_i32, %c0_i32_0 : i32, i32
  }
  func.func @transform_13(%arg0: i32) -> (i32, i32) {
    %c0_i32 = arith.constant 0 : i32
    %c0_i32_0 = arith.constant 0 : i32
    %c0_i32_1 = arith.constant 0 : i32
    return %c0_i32, %c0_i32_0 : i32, i32
  }
  func.func @transform_14(%arg0: i32) -> (i32, i32) {
    %c0_i32 = arith.constant 0 : i32
    %c0_i32_0 = arith.constant 0 : i32
    %c0_i32_1 = arith.constant 0 : i32
    return %c0_i32, %c0_i32_0 : i32, i32
  }
  func.func @transform_15(%arg0: i32) -> (i32, i32) {
    %c0_i32 = arith.constant 0 : i32
    %c0_i32_0 = arith.constant 0 : i32
    %c0_i32_1 = arith.constant 0 : i32
    return %c0_i32, %c0_i32_0 : i32, i32
  }
  func.func @transform_16(%arg0: i32) -> (i32, i32) {
    %c0_i32 = arith.constant 0 : i32
    %c0_i32_0 = arith.constant 0 : i32
    return %arg0, %c0_i32 : i32, i32
  }
}

</mosaic_0001>

<llo_original>
// kernel: tpu_custom_call.1
$region0: #{tpu_custom_call.1}
  #allocation0 [shape = 'u32[]', space=smem, size = 0x4, offset = 0x4, fixed_abs, tag = 'smem constant byte address 0x4 - core index']
  #allocation1 [shape = 'u32[144,128]{1,0:T(1,128)}', space=vmem, size = 0x12000, scoped, tag = 'internal scratch']
  %s0 = inlined_call_operand.vmem [shape: f32[1,256], index: 0, kind: input, shape index: {}]
  %s1 = inlined_call_operand.vmem [shape: f32[16,3], index: 1, kind: input, shape index: {}]
  %s2 = inlined_call_operand.vmem [shape: f32[3,128], index: 2, kind: input, shape index: {}]
  %s3 = inlined_call_operand.vmem [shape: f32[1,128], index: 3, kind: input, shape index: {}]
  %s4 = inlined_call_operand.vmem [shape: bf16[128,256], index: 4, kind: input, shape index: {}]
  %s5 = inlined_call_operand.vmem [shape: f32[1,256], index: 5, kind: input, shape index: {}]
  %s6 = inlined_call_operand.hbm [shape: bf16[256,256], index: 6, kind: input, shape index: {}]
  %s7 = inlined_call_operand.vmem [shape: f32[1,256], index: 7, kind: input, shape index: {}]
  %s8 = inlined_call_operand.vmem [shape: f32[1,256], index: 8, kind: input, shape index: {}]
  %s9 = inlined_call_operand.vmem [shape: f32[1,256], index: 9, kind: input, shape index: {}]
  %s10 = inlined_call_operand.hbm [shape: bf16[256,256], index: 10, kind: input, shape index: {}]
  %s11 = inlined_call_operand.vmem [shape: f32[1,256], index: 11, kind: input, shape index: {}]
  %s12 = inlined_call_operand.hbm [shape: bf16[256,256], index: 12, kind: input, shape index: {}]
  %s13 = inlined_call_operand.vmem [shape: f32[1,256], index: 13, kind: input, shape index: {}]
  %s14 = inlined_call_operand.vmem [shape: bf16[256,3], index: 14, kind: input, shape index: {}]
  %s15 = inlined_call_operand.vmem [shape: f32[1,3], index: 15, kind: input, shape index: {}]
  %s16 = inlined_call_operand.vmem [shape: f32[16,3], index: 16, kind: output, shape index: {}]
  %s17 = sld [smem:[#allocation0]]
  $region86: #{tpu_custom_call.1} parent=0
    _
  %s19 = ssub.s32 1, %s17
  %s20 = scalar_select 0, %s19, %s17
  $region1: #{tpu_custom_call.1} parent=0
    #allocation2 [shape = 'u8[131072]{0}', space=vmem, size = 0x20000, scoped, tag = 'input window, operand 6, single buffered']
    #allocation3 [shape = 's32[1]{0}', space=sflag, size = 0x4, scoped, tag = 'scoped memory for tpu_custom_call.1']
    #allocation4 [shape = 'u8[131072]{0}', space=vmem, size = 0x20000, scoped, tag = 'input window, operand 10, single buffered']
    #allocation5 [shape = 's32[1]{0}', space=sflag, size = 0x4, scoped, tag = 'scoped memory for tpu_custom_call.1']
    #allocation6 [shape = 'u8[131072]{0}', space=vmem, size = 0x20000, scoped, tag = 'input window, operand 12, single buffered']
    %21 = vsyncpa [#allocation3], 0
    %22 = vsyncpa [#allocation5], 0
    // Predicated region
    $region2: #{tpu_custom_call.1} parent=1 // pred_check
      _
    $region3: #{tpu_custom_call.1} parent=1 // pred_check_branch
      %24 = sbr.rel (0) target = $region5
    $region4: #{tpu_custom_call.1} parent=1 // pred_region
      _
    $region5: #{tpu_custom_call.1} parent=1 // pred_fallthru
      _
    // Predicated region
    $region6: #{tpu_custom_call.1} parent=1 // pred_check
      _
    $region7: #{tpu_custom_call.1} parent=1 // pred_check_branch
      %26 = sbr.rel (0) target = $region9
    $region8: #{tpu_custom_call.1} parent=1 // pred_region
      _
    $region9: #{tpu_custom_call.1} parent=1 // pred_fallthru
      _
    // Predicated region
    $region10: #{tpu_custom_call.1} parent=1 // pred_check
      _
    $region11: #{tpu_custom_call.1} parent=1 // pred_check_branch
      %28 = sbr.rel (0) target = $region13
    $region12: #{tpu_custom_call.1} parent=1 // pred_region
      _
    $region13: #{tpu_custom_call.1} parent=1 // pred_fallthru
      _
    // Predicated region
    $region14: #{tpu_custom_call.1} parent=1 // pred_check
      _
    $region15: #{tpu_custom_call.1} parent=1 // pred_check_branch
      %30 = sbr.rel (0) target = $region17
    $region16: #{tpu_custom_call.1} parent=1 // pred_region
      _
    $region17: #{tpu_custom_call.1} parent=1 // pred_fallthru
      _
    // Predicated region
    $region18: #{tpu_custom_call.1} parent=1 // pred_check
      _
    $region19: #{tpu_custom_call.1} parent=1 // pred_check_branch
      %32 = sbr.rel (0) target = $region21
    $region20: #{tpu_custom_call.1} parent=1 // pred_region
      _
    $region21: #{tpu_custom_call.1} parent=1 // pred_fallthru
      _
    // Predicated region
    $region22: #{tpu_custom_call.1} parent=1 // pred_check
      _
    $region23: #{tpu_custom_call.1} parent=1 // pred_check_branch
      %34 = sbr.rel (0) target = $region25
    $region24: #{tpu_custom_call.1} parent=1 // pred_region
      _
    $region25: #{tpu_custom_call.1} parent=1 // pred_fallthru
      _
    // Predicated region
    $region26: #{tpu_custom_call.1} parent=1 // pred_check
      _
    $region27: #{tpu_custom_call.1} parent=1 // pred_check_branch
      %36 = sbr.rel (0) target = $region29
    $region28: #{tpu_custom_call.1} parent=1 // pred_region
      %s38 = ssub.s32 4096, 4096
      %39 = vsyncadd [#allocation3], %s38
      %s40 = sshll.u32 [#allocation2], 4
      %s41 = int_to_ptr.vmem [resolvable:$true] %s40
      %46 = dma.hbm_to_vmem [thread:$0]  %s6, 4096, %s41, [#allocation3], 128, 128, 8
    $region29: #{tpu_custom_call.1} parent=1 // pred_fallthru
      _
    // Predicated region
    $region30: #{tpu_custom_call.1} parent=1 // pred_check
      _
    $region31: #{tpu_custom_call.1} parent=1 // pred_check_branch
      %48 = sbr.rel (0) target = $region33
    $region32: #{tpu_custom_call.1} parent=1 // pred_region
      _
    $region33: #{tpu_custom_call.1} parent=1 // pred_fallthru
      _
    // Predicated region
    $region34: #{tpu_custom_call.1} parent=1 // pred_check
      _
    $region35: #{tpu_custom_call.1} parent=1 // pred_check_branch
      %50 = sbr.rel (0) target = $region37
    $region36: #{tpu_custom_call.1} parent=1 // pred_region
      _
    $region37: #{tpu_custom_call.1} parent=1 // pred_fallthru
      _
    // Predicated region
    $region38: #{tpu_custom_call.1} parent=1 // pred_check
      _
    $region39: #{tpu_custom_call.1} parent=1 // pred_check_branch
      %52 = sbr.rel (0) target = $region41
    $region40: #{tpu_custom_call.1} parent=1 // pred_region
      _
    $region41: #{tpu_custom_call.1} parent=1 // pred_fallthru
      _
    // Predicated region
    $region42: #{tpu_custom_call.1} parent=1 // pred_check
      _
    $region43: #{tpu_custom_call.1} parent=1 // pred_check_branch
      %54 = sbr.rel (0) target = $region45
    $region44: #{tpu_custom_call.1} parent=1 // pred_region
      %s56 = ssub.s32 4096, 4096
      %57 = vsyncadd [#allocation5], %s56
      %s58 = sshll.u32 [#allocation4], 4
      %s59 = int_to_ptr.vmem [resolvable:$true] %s58
      %64 = dma.hbm_to_vmem [thread:$0]  %s10, 4096, %s59, [#allocation5], 128, 128, 8
    $region45: #{tpu_custom_call.1} parent=1 // pred_fallthru
      _
    // Predicated region
    $region46: #{tpu_custom_call.1} parent=1 // pred_check
      _
    $region47: #{tpu_custom_call.1} parent=1 // pred_check_branch
      %66 = sbr.rel (0) target = $region49
    $region48: #{tpu_custom_call.1} parent=1 // pred_region
      _
    $region49: #{tpu_custom_call.1} parent=1 // pred_fallthru
      _
    // Predicated region
    $region50: #{tpu_custom_call.1} parent=1 // pred_check
      _
    $region51: #{tpu_custom_call.1} parent=1 // pred_check_branch
      %68 = sbr.rel (0) target = $region53
    $region52: #{tpu_custom_call.1} parent=1 // pred_region
      %s70 = ssub.s32 4096, 4096
      %71 = vsyncadd [#allocation5], %s70
      %s72 = sshll.u32 [#allocation6], 4
      %s73 = int_to_ptr.vmem [resolvable:$true] %s72
      %78 = dma.hbm_to_vmem [thread:$0]  %s12, 4096, %s73, [#allocation5], 128, 128, 8
    $region53: #{tpu_custom_call.1} parent=1 // pred_fallthru
      _
    // Predicated region
    $region54: #{tpu_custom_call.1} parent=1 // pred_check
      _
    $region55: #{tpu_custom_call.1} parent=1 // pred_check_branch
      %80 = sbr.rel (0) target = $region57
    $region56: #{tpu_custom_call.1} parent=1 // pred_region
      _
    $region57: #{tpu_custom_call.1} parent=1 // pred_fallthru
      _
    // Predicated region
    $region58: #{tpu_custom_call.1} parent=1 // pred_check
      _
    $region59: #{tpu_custom_call.1} parent=1 // pred_check_branch
      %82 = sbr.rel (0) target = $region61
    $region60: #{tpu_custom_call.1} parent=1 // pred_region
      _
    $region61: #{tpu_custom_call.1} parent=1 // pred_fallthru
      _
    // Predicated region
    $region62: #{tpu_custom_call.1} parent=1 // pred_check
      _
    $region63: #{tpu_custom_call.1} parent=1 // pred_check_branch
      %84 = sbr.rel (0) target = $region65
    $region64: #{tpu_custom_call.1} parent=1 // pred_region
      _
    $region65: #{tpu_custom_call.1} parent=1 // pred_fallthru
      _
    // Predicated region
    $region66: #{tpu_custom_call.1} parent=1 // pred_check
      _
    $region67: #{tpu_custom_call.1} parent=1 // pred_check_branch
      %86 = sbr.rel (0) target = $region69
    $region68: #{tpu_custom_call.1} parent=1 // pred_region
      %87 = dma.done [#allocation3], 4096
    $region69: #{tpu_custom_call.1} parent=1 // pred_fallthru
      _
    // Predicated region
    $region70: #{tpu_custom_call.1} parent=1 // pred_check
      _
    $region71: #{tpu_custom_call.1} parent=1 // pred_check_branch
      %89 = sbr.rel (0) target = $region73
    $region72: #{tpu_custom_call.1} parent=1 // pred_region
      %90 = dma.done [#allocation5], 4096
    $region73: #{tpu_custom_call.1} parent=1 // pred_fallthru
      _
    // Predicated region
    $region74: #{tpu_custom_call.1} parent=1 // pred_check
      _
    $region75: #{tpu_custom_call.1} parent=1 // pred_check_branch
      %92 = sbr.rel (0) target = $region77
    $region76: #{tpu_custom_call.1} parent=1 // pred_region
      %93 = dma.done [#allocation5], 4096
    $region77: #{tpu_custom_call.1} parent=1 // pred_fallthru
      _
    %v95 = vld [vmem:[%s1] sm:$0xff]
    %v96 = vld [vmem:[%s1 + $0x8] sm:$0xff]
    %v97 = vld [vmem:[%s2] sm:$0x7]
    %99 = vset.pattern.permute.xlu0 0
    %100 = vperm.xlu0 %99, %v95
    %v101 = vpop.permute.xlu0 %100
    %104 = vset.pattern.permute.xlu0 0
    %105 = vperm.xlu0 %104, %v96
    %v106 = vpop.permute.xlu0 %105
    %v108 = vlaneseq
    %v109 = vshrl.u32 %v108, 7
    %v110 = vsub.s32 0, %v109
    %v111 = vrot.slane %v97, %v110
    %v112 = vmul.f32 %v101, %v111
    %v113 = vmul.f32 %v106, %v111
    %114 = vset.pattern.permute.xlu0 1
    %115 = vperm.xlu0 %114, %v95
    %v116 = vpop.permute.xlu0 %115
    %118 = vset.pattern.permute.xlu0 1
    %119 = vperm.xlu0 %118, %v96
    %v120 = vpop.permute.xlu0 %119
    %v122 = vlaneseq
    %v123 = vshrl.u32 %v122, 7
    %v124 = vsub.s32 1, %v123
    %v125 = vrot.slane %v97, %v124
    %v126 = vmul.f32 %v116, %v125
    %v127 = vmul.f32 %v120, %v125
    %v128 = vadd.f32 %v112, %v126
    %v129 = vadd.f32 %v113, %v127
    %130 = vset.pattern.permute.xlu0 2
    %131 = vperm.xlu0 %130, %v95
    %v132 = vpop.permute.xlu0 %131
    %134 = vset.pattern.permute.xlu0 2
    %135 = vperm.xlu0 %134, %v96
    %v136 = vpop.permute.xlu0 %135
    %v138 = vlaneseq
    %v139 = vshrl.u32 %v138, 7
    %v140 = vsub.s32 2, %v139
    %v141 = vrot.slane %v97, %v140
    %v142 = vmul.f32 %v132, %v141
    %v143 = vmul.f32 %v136, %v141
    %v144 = vadd.f32 %v128, %v142
    %v145 = vadd.f32 %v129, %v143
    %v146 = vld [vmem:[%s3] sm:$0x1]
    %v148 = vlaneseq
    %v149 = vshrl.u32 %v148, 7
    %v150 = vsub.s32 0, %v149
    %v151 = vrot.slane %v146, %v150
    %v153 = vadd.f32 %v144, %v151
    %v154 = vadd.f32 %v145, %v151
    %v155 = vmul.f32 %v153, 0.5
    %v156 = vmul.f32 %v154, 0.5
    %v157 = vmul.f32 %v153, 0.044715
    %v158 = vmul.f32 %v154, 0.044715
    %v159 = vmul.f32 %v157, %v153
    %v160 = vmul.f32 %v158, %v154
    %v161 = vmul.f32 %v159, %v153
    %v162 = vmul.f32 %v160, %v154
    %v163 = vadd.f32 %v153, %v161
    %v164 = vadd.f32 %v154, %v162
    %v165 = vmul.f32 %v163, 0.7978846
    %v166 = vmul.f32 %v164, 0.7978846
    %v167 = vtanh.pop %v165
    %v168 = vtanh.pop %v166
    %v169 = vadd.f32 %v167, 1.0
    %v170 = vadd.f32 %v168, 1.0
    %v171 = vmul.f32 %v155, %v169
    %v172 = vmul.f32 %v156, %v170
    %v173 = vpack.c.bf16 %v172, %v171
    %v174 = vld [vmem:[%s4] sm:$0xff]
    %v175 = vld [vmem:[%s4 + $0x8] sm:$0xff]
    %v176 = vld [vmem:[%s4 + $0x10] sm:$0xff]
    %v177 = vld [vmem:[%s4 + $0x18] sm:$0xff]
    %v178 = vld [vmem:[%s4 + $0x20] sm:$0xff]
    %v179 = vld [vmem:[%s4 + $0x28] sm:$0xff]
    %v180 = vld [vmem:[%s4 + $0x30] sm:$0xff]
    %v181 = vld [vmem:[%s4 + $0x38] sm:$0xff]
    %v182 = vld [vmem:[%s4 + $0x40] sm:$0xff]
    %v183 = vld [vmem:[%s4 + $0x48] sm:$0xff]
    %v184 = vld [vmem:[%s4 + $0x50] sm:$0xff]
    %v185 = vld [vmem:[%s4 + $0x58] sm:$0xff]
    %v186 = vld [vmem:[%s4 + $0x60] sm:$0xff]
    %v187 = vld [vmem:[%s4 + $0x68] sm:$0xff]
    %v188 = vld [vmem:[%s4 + $0x70] sm:$0xff]
    %v189 = vld [vmem:[%s4 + $0x78] sm:$0xff]
    %v190 = vld [vmem:[%s5] sm:$0x3]
    %v192 = vlaneseq
    %v193 = vshrl.u32 %v192, 7
    %v194 = vsub.s32 0, %v193
    %v195 = vrot.slane %v190, %v194
    %v196 = vlaneseq
    %v197 = vshrl.u32 %v196, 7
    %v198 = vsub.s32 1, %v197
    %v199 = vrot.slane %v190, %v198
    %v218 = vunpack.c.l.b16 %v174
    %v219 = vunpack.c.h.b16 %v174
    %v220 = vunpack.c.l.b16 %v175
    %v221 = vunpack.c.h.b16 %v175
    %v222 = vunpack.c.l.b16 %v176
    %v223 = vunpack.c.h.b16 %v176
    %v224 = vunpack.c.l.b16 %v177
    %v225 = vunpack.c.h.b16 %v177
    %v226 = vunpack.c.l.b16 %v178
    %v227 = vunpack.c.h.b16 %v178
    %v228 = vunpack.c.l.b16 %v179
    %v229 = vunpack.c.h.b16 %v179
    %v230 = vunpack.c.l.b16 %v180
    %v231 = vunpack.c.h.b16 %v180
    %v232 = vunpack.c.l.b16 %v181
    %v233 = vunpack.c.h.b16 %v181
    %v234 = vunpack.c.l.b16 %v182
    %v235 = vunpack.c.h.b16 %v182
    %v236 = vunpack.c.l.b16 %v183
    %v237 = vunpack.c.h.b16 %v183
    %v238 = vunpack.c.l.b16 %v184
    %v239 = vunpack.c.h.b16 %v184
    %v240 = vunpack.c.l.b16 %v185
    %v241 = vunpack.c.h.b16 %v185
    %v242 = vunpack.c.l.b16 %v186
    %v243 = vunpack.c.h.b16 %v186
    %v244 = vunpack.c.l.b16 %v187
    %v245 = vunpack.c.h.b16 %v187
    %v246 = vunpack.c.l.b16 %v188
    %v247 = vunpack.c.h.b16 %v188
    %v248 = vunpack.c.l.b16 %v189
    %v249 = vunpack.c.h.b16 %v189
    %v250 = vpack.c.b16 %v220, %v218
    %v251 = vpack.c.b16 %v221, %v219
    %v252 = vpack.c.b16 %v224, %v222
    %v253 = vpack.c.b16 %v225, %v223
    %v254 = vpack.c.b16 %v228, %v226
    %v255 = vpack.c.b16 %v229, %v227
    %v256 = vpack.c.b16 %v232, %v230
    %v257 = vpack.c.b16 %v233, %v231
    %v258 = vpack.c.b16 %v236, %v234
    %v259 = vpack.c.b16 %v237, %v235
    %v260 = vpack.c.b16 %v240, %v238
    %v261 = vpack.c.b16 %v241, %v239
    %v262 = vpack.c.b16 %v244, %v242
    %v263 = vpack.c.b16 %v245, %v243
    %v264 = vpack.c.b16 %v248, %v246
    %v265 = vpack.c.b16 %v249, %v247
    %282 = vmatprep.subr.bf16.mxu0 %v251
    %283 = vmatpush1.bf16.msra.mxu0 %v250
    %284 = vmatprep.subr.bf16.mxu0 %v253
    %285 = vmatpush1.bf16.msra.mxu0 %v252
    %286 = vmatprep.subr.bf16.mxu0 %v255
    %287 = vmatpush1.bf16.msra.mxu0 %v254
    %288 = vmatprep.subr.bf16.mxu0 %v257
    %289 = vmatpush1.bf16.msra.mxu0 %v256
    %290 = vmatprep.subr.bf16.mxu0 %v259
    %291 = vmatpush1.bf16.msra.mxu0 %v258
    %292 = vmatprep.subr.bf16.mxu0 %v261
    %293 = vmatpush1.bf16.msra.mxu0 %v260
    %294 = vmatprep.subr.bf16.mxu0 %v263
    %295 = vmatpush1.bf16.msra.mxu0 %v262
    %296 = vmatprep.subr.bf16.mxu0 %v265
    %297 = vmatpush1.bf16.msra.mxu0 %v264
    %298 = vmatprep.subr.bf16.mxu0 0
    %299 = vmatpush1.bf16.msra.mxu0 0
    %300 = vmatprep.subr.bf16.mxu0 0
    %301 = vmatpush1.bf16.msra.mxu0 0
    %302 = vmatprep.subr.bf16.mxu0 0
    %303 = vmatpush1.bf16.msra.mxu0 0
    %304 = vmatprep.subr.bf16.mxu0 0
    %305 = vmatpush1.bf16.msra.mxu0 0
    %306 = vmatprep.subr.bf16.mxu0 0
    %307 = vmatpush1.bf16.msra.mxu0 0
    %308 = vmatprep.subr.bf16.mxu0 0
    %309 = vmatpush1.bf16.msra.mxu0 0
    %310 = vmatprep.subr.bf16.mxu0 0
    %311 = vmatpush1.bf16.msra.mxu0 0
    %312 = vmatprep.subr.bf16.mxu0 0
    %313 = vmatpush1.bf16.msra.mxu0 0
    %314 = vmatprep.mubr.bf16.mxu0 0
    %315 = vmatmul.mubr.bf16.gmra.mrb[0].mxu0 %v173
    %v316 = vpop.f32.mrb[0].mxu0
    %v317 = vadd.f32 %v195, %v316
    %v318 = vpop.f32.mrb[0].mxu0
    %v319 = vadd.f32 %v199, %v318
    %v320 = vpop.f32.mrb[0].mxu0
    %v321 = vadd.f32 %v195, %v320
    %v322 = vpop.f32.mrb[0].mxu0
    %v323 = vadd.f32 %v199, %v322
    %324 = vdwg.mxu0
    %v325 = vmul.f32 %v317, 0.5
    %v326 = vmul.f32 %v319, 0.5
    %v327 = vmul.f32 %v321, 0.5
    %v328 = vmul.f32 %v323, 0.5
    %v329 = vmul.f32 %v317, 0.044715
    %v330 = vmul.f32 %v319, 0.044715
    %v331 = vmul.f32 %v321, 0.044715
    %v332 = vmul.f32 %v323, 0.044715
    %v333 = vmul.f32 %v329, %v317
    %v334 = vmul.f32 %v330, %v319
    %v335 = vmul.f32 %v331, %v321
    %v336 = vmul.f32 %v332, %v323
    %v337 = vmul.f32 %v333, %v317
    %v338 = vmul.f32 %v334, %v319
    %v339 = vmul.f32 %v335, %v321
    %v340 = vmul.f32 %v336, %v323
    %v341 = vadd.f32 %v317, %v337
    %v342 = vadd.f32 %v319, %v338
    %v343 = vadd.f32 %v321, %v339
    %v344 = vadd.f32 %v323, %v340
    %v345 = vmul.f32 %v341, 0.7978846
    %v346 = vmul.f32 %v342, 0.7978846
    %v347 = vmul.f32 %v343, 0.7978846
    %v348 = vmul.f32 %v344, 0.7978846
    %v349 = vtanh.pop %v345
    %v350 = vtanh.pop %v346
    %v351 = vtanh.pop %v347
    %v352 = vtanh.pop %v348
    %v353 = vadd.f32 %v349, 1.0
    %v354 = vadd.f32 %v350, 1.0
    %v355 = vadd.f32 %v351, 1.0
    %v356 = vadd.f32 %v352, 1.0
    %v357 = vmul.f32 %v325, %v353
    %v358 = vmul.f32 %v326, %v354
    %v359 = vmul.f32 %v327, %v355
    %v360 = vmul.f32 %v328, %v356
    %v361 = vpack.c.bf16 %v359, %v357
    %v362 = vpack.c.bf16 %v360, %v358
    %v363 = vld [vmem:[#allocation2] sm:$0xff]
    %v364 = vld [vmem:[#allocation2 + $0x8] sm:$0xff]
    %v365 = vld [vmem:[#allocation2 + $0x10] sm:$0xff]
    %v366 = vld [vmem:[#allocation2 + $0x18] sm:$0xff]
    %v367 = vld [vmem:[#allocation2 + $0x20] sm:$0xff]
    %v368 = vld [vmem:[#allocation2 + $0x28] sm:$0xff]
    %v369 = vld [vmem:[#allocation2 + $0x30] sm:$0xff]
    %v370 = vld [vmem:[#allocation2 + $0x38] sm:$0xff]
    %v371 = vld [vmem:[#allocation2 + $0x40] sm:$0xff]
    %v372 = vld [vmem:[#allocation2 + $0x48] sm:$0xff]
    %v373 = vld [vmem:[#allocation2 + $0x50] sm:$0xff]
    %v374 = vld [vmem:[#allocation2 + $0x58] sm:$0xff]
    %v375 = vld [vmem:[#allocation2 + $0x60] sm:$0xff]
    %v376 = vld [vmem:[#allocation2 + $0x68] sm:$0xff]
    %v377 = vld [vmem:[#allocation2 + $0x70] sm:$0xff]
    %v378 = vld [vmem:[#allocation2 + $0x78] sm:$0xff]
    %v379 = vld [vmem:[#allocation2 + $0x80] sm:$0xff]
    %v380 = vld [vmem:[#allocation2 + $0x88] sm:$0xff]
    %v381 = vld [vmem:[#allocation2 + $0x90] sm:$0xff]
    %v382 = vld [vmem:[#allocation2 + $0x98] sm:$0xff]
    %v383 = vld [vmem:[#allocation2 + $0xa0] sm:$0xff]
    %v384 = vld [vmem:[#allocation2 + $0xa8] sm:$0xff]
    %v385 = vld [vmem:[#allocation2 + $0xb0] sm:$0xff]
    %v386 = vld [vmem:[#allocation2 + $0xb8] sm:$0xff]
    %v387 = vld [vmem:[#allocation2 + $0xc0] sm:$0xff]
    %v388 = vld [vmem:[#allocation2 + $0xc8] sm:$0xff]
    %v389 = vld [vmem:[#allocation2 + $0xd0] sm:$0xff]
    %v390 = vld [vmem:[#allocation2 + $0xd8] sm:$0xff]
    %v391 = vld [vmem:[#allocation2 + $0xe0] sm:$0xff]
    %v392 = vld [vmem:[#allocation2 + $0xe8] sm:$0xff]
    %v393 = vld [vmem:[#allocation2 + $0xf0] sm:$0xff]
    %v394 = vld [vmem:[#allocation2 + $0xf8] sm:$0xff]
    %v395 = vld [vmem:[%s7] sm:$0x3]
    %v397 = vlaneseq
    %v398 = vshrl.u32 %v397, 7
    %v399 = vsub.s32 0, %v398
    %v400 = vrot.slane %v395, %v399
    %v401 = vlaneseq
    %v402 = vshrl.u32 %v401, 7
    %v403 = vsub.s32 1, %v402
    %v404 = vrot.slane %v395, %v403
    %v439 = vunpack.c.l.b16 %v363
    %v440 = vunpack.c.h.b16 %v363
    %v441 = vunpack.c.l.b16 %v364
    %v442 = vunpack.c.h.b16 %v364
    %v443 = vunpack.c.l.b16 %v365
    %v444 = vunpack.c.h.b16 %v365
    %v445 = vunpack.c.l.b16 %v366
    %v446 = vunpack.c.h.b16 %v366
    %v447 = vunpack.c.l.b16 %v367
    %v448 = vunpack.c.h.b16 %v367
    %v449 = vunpack.c.l.b16 %v368
    %v450 = vunpack.c.h.b16 %v368
    %v451 = vunpack.c.l.b16 %v369
    %v452 = vunpack.c.h.b16 %v369
    %v453 = vunpack.c.l.b16 %v370
    %v454 = vunpack.c.h.b16 %v370
    %v455 = vunpack.c.l.b16 %v371
    %v456 = vunpack.c.h.b16 %v371
    %v457 = vunpack.c.l.b16 %v372
    %v458 = vunpack.c.h.b16 %v372
    %v459 = vunpack.c.l.b16 %v373
    %v460 = vunpack.c.h.b16 %v373
    %v461 = vunpack.c.l.b16 %v374
    %v462 = vunpack.c.h.b16 %v374
    %v463 = vunpack.c.l.b16 %v375
    %v464 = vunpack.c.h.b16 %v375
    %v465 = vunpack.c.l.b16 %v376
    %v466 = vunpack.c.h.b16 %v376
    %v467 = vunpack.c.l.b16 %v377
    %v468 = vunpack.c.h.b16 %v377
    %v469 = vunpack.c.l.b16 %v378
    %v470 = vunpack.c.h.b16 %v378
    %v471 = vunpack.c.l.b16 %v379
    %v472 = vunpack.c.h.b16 %v379
    %v473 = vunpack.c.l.b16 %v380
    %v474 = vunpack.c.h.b16 %v380
    %v475 = vunpack.c.l.b16 %v381
    %v476 = vunpack.c.h.b16 %v381
    %v477 = vunpack.c.l.b16 %v382
    %v478 = vunpack.c.h.b16 %v382
    %v479 = vunpack.c.l.b16 %v383
    %v480 = vunpack.c.h.b16 %v383
    %v481 = vunpack.c.l.b16 %v384
    %v482 = vunpack.c.h.b16 %v384
    %v483 = vunpack.c.l.b16 %v385
    %v484 = vunpack.c.h.b16 %v385
    %v485 = vunpack.c.l.b16 %v386
    %v486 = vunpack.c.h.b16 %v386
    %v487 = vunpack.c.l.b16 %v387
    %v488 = vunpack.c.h.b16 %v387
    %v489 = vunpack.c.l.b16 %v388
    %v490 = vunpack.c.h.b16 %v388
    %v491 = vunpack.c.l.b16 %v389
    %v492 = vunpack.c.h.b16 %v389
    %v493 = vunpack.c.l.b16 %v390
    %v494 = vunpack.c.h.b16 %v390
    %v495 = vunpack.c.l.b16 %v391
    %v496 = vunpack.c.h.b16 %v391
    %v497 = vunpack.c.l.b16 %v392
    %v498 = vunpack.c.h.b16 %v392
    %v499 = vunpack.c.l.b16 %v393
    %v500 = vunpack.c.h.b16 %v393
    %v501 = vunpack.c.l.b16 %v394
    %v502 = vunpack.c.h.b16 %v394
    %v503 = vpack.c.b16 %v441, %v439
    %v504 = vpack.c.b16 %v442, %v440
    %v505 = vpack.c.b16 %v445, %v443
    %v506 = vpack.c.b16 %v446, %v444
    %v507 = vpack.c.b16 %v449, %v447
    %v508 = vpack.c.b16 %v450, %v448
    %v509 = vpack.c.b16 %v453, %v451
    %v510 = vpack.c.b16 %v454, %v452
    %v511 = vpack.c.b16 %v457, %v455
    %v512 = vpack.c.b16 %v458, %v456
    %v513 = vpack.c.b16 %v461, %v459
    %v514 = vpack.c.b16 %v462, %v460
    %v515 = vpack.c.b16 %v465, %v463
    %v516 = vpack.c.b16 %v466, %v464
    %v517 = vpack.c.b16 %v469, %v467
    %v518 = vpack.c.b16 %v470, %v468
    %v519 = vpack.c.b16 %v473, %v471
    %v520 = vpack.c.b16 %v474, %v472
    %v521 = vpack.c.b16 %v477, %v475
    %v522 = vpack.c.b16 %v478, %v476
    %v523 = vpack.c.b16 %v481, %v479
    %v524 = vpack.c.b16 %v482, %v480
    %v525 = vpack.c.b16 %v485, %v483
    %v526 = vpack.c.b16 %v486, %v484
    %v527 = vpack.c.b16 %v489, %v487
    %v528 = vpack.c.b16 %v490, %v488
    %v529 = vpack.c.b16 %v493, %v491
    %v530 = vpack.c.b16 %v494, %v492
    %v531 = vpack.c.b16 %v497, %v495
    %v532 = vpack.c.b16 %v498, %v496
    %v533 = vpack.c.b16 %v501, %v499
    %v534 = vpack.c.b16 %v502, %v500
    %567 = vmatprep.subr.bf16.mxu0 %v504
    %568 = vmatpush1.bf16.msra.mxu0 %v503
    %569 = vmatprep.subr.bf16.mxu0 %v506
    %570 = vmatpush1.bf16.msra.mxu0 %v505
    %571 = vmatprep.subr.bf16.mxu0 %v508
    %572 = vmatpush1.bf16.msra.mxu0 %v507
    %573 = vmatprep.subr.bf16.mxu0 %v510
    %574 = vmatpush1.bf16.msra.mxu0 %v509
    %575 = vmatprep.subr.bf16.mxu0 %v512
    %576 = vmatpush1.bf16.msra.mxu0 %v511
    %577 = vmatprep.subr.bf16.mxu0 %v514
    %578 = vmatpush1.bf16.msra.mxu0 %v513
    %579 = vmatprep.subr.bf16.mxu0 %v516
    %580 = vmatpush1.bf16.msra.mxu0 %v515
    %581 = vmatprep.subr.bf16.mxu0 %v518
    %582 = vmatpush1.bf16.msra.mxu0 %v517
    %583 = vmatprep.subr.bf16.mxu0 %v520
    %584 = vmatpush1.bf16.msra.mxu0 %v519
    %585 = vmatprep.subr.bf16.mxu0 %v522
    %586 = vmatpush1.bf16.msra.mxu0 %v521
    %587 = vmatprep.subr.bf16.mxu0 %v524
    %588 = vmatpush1.bf16.msra.mxu0 %v523
    %589 = vmatprep.subr.bf16.mxu0 %v526
    %590 = vmatpush1.bf16.msra.mxu0 %v525
    %591 = vmatprep.subr.bf16.mxu0 %v528
    %592 = vmatpush1.bf16.msra.mxu0 %v527
    %593 = vmatprep.subr.bf16.mxu0 %v530
    %594 = vmatpush1.bf16.msra.mxu0 %v529
    %595 = vmatprep.subr.bf16.mxu0 %v532
    %596 = vmatpush1.bf16.msra.mxu0 %v531
    %597 = vmatprep.subr.bf16.mxu0 %v534
    %598 = vmatpush1.bf16.msra.mxu0 %v533
    %599 = vmatprep.mubr.bf16.mxu0 %v362
    %600 = vmatmul.mubr.bf16.gmra.mrb[0].mxu0 %v361
    %v601 = vpop.f32.mrb[0].mxu0
    %v602 = vadd.f32 %v400, %v601
    %v603 = vpop.f32.mrb[0].mxu0
    %v604 = vadd.f32 %v404, %v603
    %v605 = vpop.f32.mrb[0].mxu0
    %v606 = vadd.f32 %v400, %v605
    %v607 = vpop.f32.mrb[0].mxu0
    %v608 = vadd.f32 %v404, %v607
    %609 = vdwg.mxu0
    %v610 = vld [vmem:[%s8] sm:$0x3]
    %v611 = vld [vmem:[%s9] sm:$0x3]
    %v612 = vadd.f32 %v602, %v604
    %613 = vadd.xlane.f32.xlu0 %v612
    %v614 = vpop.xlane.xlu0 %613
    %v615 = vadd.f32 %v606, %v608
    %616 = vadd.xlane.f32.xlu0 %v615
    %v617 = vpop.xlane.xlu0 %616
    %v618 = vrcp.pop 256.0
    %v619 = vmul.f32 %v614, %v618
    %v620 = vmul.f32 %v617, %v618
    %v621 = vsub.f32 %v602, %v619
    %v622 = vsub.f32 %v604, %v619
    %v623 = vsub.f32 %v606, %v620
    %v624 = vsub.f32 %v608, %v620
    %v625 = vmul.f32 %v621, %v621
    %v626 = vmul.f32 %v622, %v622
    %v627 = vmul.f32 %v623, %v623
    %v628 = vmul.f32 %v624, %v624
    %v629 = vadd.f32 %v625, %v626
    %630 = vadd.xlane.f32.xlu0 %v629
    %v631 = vpop.xlane.xlu0 %630
    %v632 = vadd.f32 %v627, %v628
    %633 = vadd.xlane.f32.xlu0 %v632
    %v634 = vpop.xlane.xlu0 %633
    %v635 = vmul.f32 %v631, %v618
    %v636 = vmul.f32 %v634, %v618
    %v637 = vadd.f32 %v635, 1e-05
    %v638 = vadd.f32 %v636, 1e-05
    %v639 = vrsqrt.pop %v637
    %v640 = vrsqrt.pop %v638
    %v641 = vmul.f32 %v621, %v639
    %v642 = vmul.f32 %v622, %v639
    %v643 = vmul.f32 %v623, %v640
    %v644 = vmul.f32 %v624, %v640
    %v646 = vlaneseq
    %v647 = vshrl.u32 %v646, 7
    %v648 = vsub.s32 0, %v647
    %v649 = vrot.slane %v610, %v648
    %v650 = vlaneseq
    %v651 = vshrl.u32 %v650, 7
    %v652 = vsub.s32 1, %v651
    %v653 = vrot.slane %v610, %v652
    %v656 = vmul.f32 %v641, %v649
    %v657 = vmul.f32 %v642, %v653
    %v658 = vmul.f32 %v643, %v649
    %v659 = vmul.f32 %v644, %v653
    %v661 = vlaneseq
    %v662 = vshrl.u32 %v661, 7
    %v663 = vsub.s32 0, %v662
    %v664 = vrot.slane %v611, %v663
    %v665 = vlaneseq
    %v666 = vshrl.u32 %v665, 7
    %v667 = vsub.s32 1, %v666
    %v668 = vrot.slane %v611, %v667
    %v671 = vadd.f32 %v656, %v664
    %v672 = vadd.f32 %v657, %v668
    %v673 = vadd.f32 %v658, %v664
    %v674 = vadd.f32 %v659, %v668
    %v675 = vmul.f32 %v671, 0.5
    %v676 = vmul.f32 %v672, 0.5
    %v677 = vmul.f32 %v673, 0.5
    %v678 = vmul.f32 %v674, 0.5
    %v679 = vmul.f32 %v671, 0.044715
    %v680 = vmul.f32 %v672, 0.044715
    %v681 = vmul.f32 %v673, 0.044715
    %v682 = vmul.f32 %v674, 0.044715
    %v683 = vmul.f32 %v679, %v671
    %v684 = vmul.f32 %v680, %v672
    %v685 = vmul.f32 %v681, %v673
    %v686 = vmul.f32 %v682, %v674
    %v687 = vmul.f32 %v683, %v671
    %v688 = vmul.f32 %v684, %v672
    %v689 = vmul.f32 %v685, %v673
    %v690 = vmul.f32 %v686, %v674
    %v691 = vadd.f32 %v671, %v687
    %v692 = vadd.f32 %v672, %v688
    %v693 = vadd.f32 %v673, %v689
    %v694 = vadd.f32 %v674, %v690
    %v695 = vmul.f32 %v691, 0.7978846
    %v696 = vmul.f32 %v692, 0.7978846
    %v697 = vmul.f32 %v693, 0.7978846
    %v698 = vmul.f32 %v694, 0.7978846
    %v699 = vtanh.pop %v695
    %v700 = vtanh.pop %v696
    %v701 = vtanh.pop %v697
    %v702 = vtanh.pop %v698
    %v703 = vadd.f32 %v699, 1.0
    %v704 = vadd.f32 %v700, 1.0
    %v705 = vadd.f32 %v701, 1.0
    %v706 = vadd.f32 %v702, 1.0
    %v707 = vmul.f32 %v675, %v703
    %v708 = vmul.f32 %v676, %v704
    %v709 = vmul.f32 %v677, %v705
    %v710 = vmul.f32 %v678, %v706
    %v711 = vld [vmem:[%s0] sm:$0x3]
    %v713 = vlaneseq
    %v714 = vshrl.u32 %v713, 7
    %v715 = vsub.s32 0, %v714
    %v716 = vrot.slane %v711, %v715
    %v717 = vlaneseq
    %v718 = vshrl.u32 %v717, 7
    %v719 = vsub.s32 1, %v718
    %v720 = vrot.slane %v711, %v719
    %v723 = vadd.f32 %v707, %v716
    %v724 = vadd.f32 %v708, %v720
    %v725 = vadd.f32 %v709, %v716
    %v726 = vadd.f32 %v710, %v720
    %v727 = vpack.c.bf16 %v725, %v723
    %v728 = vpack.c.bf16 %v726, %v724
    %v729 = vld [vmem:[#allocation4] sm:$0xff]
    %v730 = vld [vmem:[#allocation4 + $0x8] sm:$0xff]
    %v731 = vld [vmem:[#allocation4 + $0x10] sm:$0xff]
    %v732 = vld [vmem:[#allocation4 + $0x18] sm:$0xff]
    %v733 = vld [vmem:[#allocation4 + $0x20] sm:$0xff]
    %v734 = vld [vmem:[#allocation4 + $0x28] sm:$0xff]
    %v735 = vld [vmem:[#allocation4 + $0x30] sm:$0xff]
    %v736 = vld [vmem:[#allocation4 + $0x38] sm:$0xff]
    %v737 = vld [vmem:[#allocation4 + $0x40] sm:$0xff]
    %v738 = vld [vmem:[#allocation4 + $0x48] sm:$0xff]
    %v739 = vld [vmem:[#allocation4 + $0x50] sm:$0xff]
    %v740 = vld [vmem:[#allocation4 + $0x58] sm:$0xff]
    %v741 = vld [vmem:[#allocation4 + $0x60] sm:$0xff]
    %v742 = vld [vmem:[#allocation4 + $0x68] sm:$0xff]
    %v743 = vld [vmem:[#allocation4 + $0x70] sm:$0xff]
    %v744 = vld [vmem:[#allocation4 + $0x78] sm:$0xff]
    %v745 = vld [vmem:[#allocation4 + $0x80] sm:$0xff]
    %v746 = vld [vmem:[#allocation4 + $0x88] sm:$0xff]
    %v747 = vld [vmem:[#allocation4 + $0x90] sm:$0xff]
    %v748 = vld [vmem:[#allocation4 + $0x98] sm:$0xff]
    %v749 = vld [vmem:[#allocation4 + $0xa0] sm:$0xff]
    %v750 = vld [vmem:[#allocation4 + $0xa8] sm:$0xff]
    %v751 = vld [vmem:[#allocation4 + $0xb0] sm:$0xff]
    %v752 = vld [vmem:[#allocation4 + $0xb8] sm:$0xff]
    %v753 = vld [vmem:[#allocation4 + $0xc0] sm:$0xff]
    %v754 = vld [vmem:[#allocation4 + $0xc8] sm:$0xff]
    %v755 = vld [vmem:[#allocation4 + $0xd0] sm:$0xff]
    %v756 = vld [vmem:[#allocation4 + $0xd8] sm:$0xff]
    %v757 = vld [vmem:[#allocation4 + $0xe0] sm:$0xff]
    %v758 = vld [vmem:[#allocation4 + $0xe8] sm:$0xff]
    %v759 = vld [vmem:[#allocation4 + $0xf0] sm:$0xff]
    %v760 = vld [vmem:[#allocation4 + $0xf8] sm:$0xff]
    %v761 = vld [vmem:[%s11] sm:$0x3]
    %v763 = vlaneseq
    %v764 = vshrl.u32 %v763, 7
    %v765 = vsub.s32 0, %v764
    %v766 = vrot.slane %v761, %v765
    %v767 = vlaneseq
    %v768 = vshrl.u32 %v767, 7
    %v769 = vsub.s32 1, %v768
    %v770 = vrot.slane %v761, %v769
    %v805 = vunpack.c.l.b16 %v729
    %v806 = vunpack.c.h.b16 %v729
    %v807 = vunpack.c.l.b16 %v730
    %v808 = vunpack.c.h.b16 %v730
    %v809 = vunpack.c.l.b16 %v731
    %v810 = vunpack.c.h.b16 %v731
    %v811 = vunpack.c.l.b16 %v732
    %v812 = vunpack.c.h.b16 %v732
    %v813 = vunpack.c.l.b16 %v733
    %v814 = vunpack.c.h.b16 %v733
    %v815 = vunpack.c.l.b16 %v734
    %v816 = vunpack.c.h.b16 %v734
    %v817 = vunpack.c.l.b16 %v735
    %v818 = vunpack.c.h.b16 %v735
    %v819 = vunpack.c.l.b16 %v736
    %v820 = vunpack.c.h.b16 %v736
    %v821 = vunpack.c.l.b16 %v737
    %v822 = vunpack.c.h.b16 %v737
    %v823 = vunpack.c.l.b16 %v738
    %v824 = vunpack.c.h.b16 %v738
    %v825 = vunpack.c.l.b16 %v739
    %v826 = vunpack.c.h.b16 %v739
    %v827 = vunpack.c.l.b16 %v740
    %v828 = vunpack.c.h.b16 %v740
    %v829 = vunpack.c.l.b16 %v741
    %v830 = vunpack.c.h.b16 %v741
    %v831 = vunpack.c.l.b16 %v742
    %v832 = vunpack.c.h.b16 %v742
    %v833 = vunpack.c.l.b16 %v743
    %v834 = vunpack.c.h.b16 %v743
    %v835 = vunpack.c.l.b16 %v744
    %v836 = vunpack.c.h.b16 %v744
    %v837 = vunpack.c.l.b16 %v745
    %v838 = vunpack.c.h.b16 %v745
    %v839 = vunpack.c.l.b16 %v746
    %v840 = vunpack.c.h.b16 %v746
    %v841 = vunpack.c.l.b16 %v747
    %v842 = vunpack.c.h.b16 %v747
    %v843 = vunpack.c.l.b16 %v748
    %v844 = vunpack.c.h.b16 %v748
    %v845 = vunpack.c.l.b16 %v749
    %v846 = vunpack.c.h.b16 %v749
    %v847 = vunpack.c.l.b16 %v750
    %v848 = vunpack.c.h.b16 %v750
    %v849 = vunpack.c.l.b16 %v751
    %v850 = vunpack.c.h.b16 %v751
    %v851 = vunpack.c.l.b16 %v752
    %v852 = vunpack.c.h.b16 %v752
    %v853 = vunpack.c.l.b16 %v753
    %v854 = vunpack.c.h.b16 %v753
    %v855 = vunpack.c.l.b16 %v754
    %v856 = vunpack.c.h.b16 %v754
    %v857 = vunpack.c.l.b16 %v755
    %v858 = vunpack.c.h.b16 %v755
    %v859 = vunpack.c.l.b16 %v756
    %v860 = vunpack.c.h.b16 %v756
    %v861 = vunpack.c.l.b16 %v757
    %v862 = vunpack.c.h.b16 %v757
    %v863 = vunpack.c.l.b16 %v758
    %v864 = vunpack.c.h.b16 %v758
    %v865 = vunpack.c.l.b16 %v759
    %v866 = vunpack.c.h.b16 %v759
    %v867 = vunpack.c.l.b16 %v760
    %v868 = vunpack.c.h.b16 %v760
    %v869 = vpack.c.b16 %v807, %v805
    %v870 = vpack.c.b16 %v808, %v806
    %v871 = vpack.c.b16 %v811, %v809
    %v872 = vpack.c.b16 %v812, %v810
    %v873 = vpack.c.b16 %v815, %v813
    %v874 = vpack.c.b16 %v816, %v814
    %v875 = vpack.c.b16 %v819, %v817
    %v876 = vpack.c.b16 %v820, %v818
    %v877 = vpack.c.b16 %v823, %v821
    %v878 = vpack.c.b16 %v824, %v822
    %v879 = vpack.c.b16 %v827, %v825
    %v880 = vpack.c.b16 %v828, %v826
    %v881 = vpack.c.b16 %v831, %v829
    %v882 = vpack.c.b16 %v832, %v830
    %v883 = vpack.c.b16 %v835, %v833
    %v884 = vpack.c.b16 %v836, %v834
    %v885 = vpack.c.b16 %v839, %v837
    %v886 = vpack.c.b16 %v840, %v838
    %v887 = vpack.c.b16 %v843, %v841
    %v888 = vpack.c.b16 %v844, %v842
    %v889 = vpack.c.b16 %v847, %v845
    %v890 = vpack.c.b16 %v848, %v846
    %v891 = vpack.c.b16 %v851, %v849
    %v892 = vpack.c.b16 %v852, %v850
    %v893 = vpack.c.b16 %v855, %v853
    %v894 = vpack.c.b16 %v856, %v854
    %v895 = vpack.c.b16 %v859, %v857
    %v896 = vpack.c.b16 %v860, %v858
    %v897 = vpack.c.b16 %v863, %v861
    %v898 = vpack.c.b16 %v864, %v862
    %v899 = vpack.c.b16 %v867, %v865
    %v900 = vpack.c.b16 %v868, %v866
    %933 = vmatprep.subr.bf16.mxu0 %v870
    %934 = vmatpush1.bf16.msra.mxu0 %v869
    %935 = vmatprep.subr.bf16.mxu0 %v872
    %936 = vmatpush1.bf16.msra.mxu0 %v871
    %937 = vmatprep.subr.bf16.mxu0 %v874
    %938 = vmatpush1.bf16.msra.mxu0 %v873
    %939 = vmatprep.subr.bf16.mxu0 %v876
    %940 = vmatpush1.bf16.msra.mxu0 %v875
    %941 = vmatprep.subr.bf16.mxu0 %v878
    %942 = vmatpush1.bf16.msra.mxu0 %v877
    %943 = vmatprep.subr.bf16.mxu0 %v880
    %944 = vmatpush1.bf16.msra.mxu0 %v879
    %945 = vmatprep.subr.bf16.mxu0 %v882
    %946 = vmatpush1.bf16.msra.mxu0 %v881
    %947 = vmatprep.subr.bf16.mxu0 %v884
    %948 = vmatpush1.bf16.msra.mxu0 %v883
    %949 = vmatprep.subr.bf16.mxu0 %v886
    %950 = vmatpush1.bf16.msra.mxu0 %v885
    %951 = vmatprep.subr.bf16.mxu0 %v888
    %952 = vmatpush1.bf16.msra.mxu0 %v887
    %953 = vmatprep.subr.bf16.mxu0 %v890
    %954 = vmatpush1.bf16.msra.mxu0 %v889
    %955 = vmatprep.subr.bf16.mxu0 %v892
    %956 = vmatpush1.bf16.msra.mxu0 %v891
    %957 = vmatprep.subr.bf16.mxu0 %v894
    %958 = vmatpush1.bf16.msra.mxu0 %v893
    %959 = vmatprep.subr.bf16.mxu0 %v896
    %960 = vmatpush1.bf16.msra.mxu0 %v895
    %961 = vmatprep.subr.bf16.mxu0 %v898
    %962 = vmatpush1.bf16.msra.mxu0 %v897
    %963 = vmatprep.subr.bf16.mxu0 %v900
    %964 = vmatpush1.bf16.msra.mxu0 %v899
    %965 = vmatprep.mubr.bf16.mxu0 %v728
    %966 = vmatmul.mubr.bf16.gmra.mrb[0].mxu0 %v727
    %v967 = vpop.f32.mrb[0].mxu0
    %v968 = vadd.f32 %v766, %v967
    %v969 = vpop.f32.mrb[0].mxu0
    %v970 = vadd.f32 %v770, %v969
    %v971 = vpop.f32.mrb[0].mxu0
    %v972 = vadd.f32 %v766, %v971
    %v973 = vpop.f32.mrb[0].mxu0
    %v974 = vadd.f32 %v770, %v973
    %975 = vdwg.mxu0
    %v976 = vmul.f32 %v968, 0.5
    %v977 = vmul.f32 %v970, 0.5
    %v978 = vmul.f32 %v972, 0.5
    %v979 = vmul.f32 %v974, 0.5
    %v980 = vmul.f32 %v968, 0.044715
    %v981 = vmul.f32 %v970, 0.044715
    %v982 = vmul.f32 %v972, 0.044715
    %v983 = vmul.f32 %v974, 0.044715
    %v984 = vmul.f32 %v980, %v968
    %v985 = vmul.f32 %v981, %v970
    %v986 = vmul.f32 %v982, %v972
    %v987 = vmul.f32 %v983, %v974
    %v988 = vmul.f32 %v984, %v968
    %v989 = vmul.f32 %v985, %v970
    %v990 = vmul.f32 %v986, %v972
    %v991 = vmul.f32 %v987, %v974
    %v992 = vadd.f32 %v968, %v988
    %v993 = vadd.f32 %v970, %v989
    %v994 = vadd.f32 %v972, %v990
    %v995 = vadd.f32 %v974, %v991
    %v996 = vmul.f32 %v992, 0.7978846
    %v997 = vmul.f32 %v993, 0.7978846
    %v998 = vmul.f32 %v994, 0.7978846
    %v999 = vmul.f32 %v995, 0.7978846
    %v1000 = vtanh.pop %v996
    %v1001 = vtanh.pop %v997
    %v1002 = vtanh.pop %v998
    %v1003 = vtanh.pop %v999
    %v1004 = vadd.f32 %v1000, 1.0
    %v1005 = vadd.f32 %v1001, 1.0
    %v1006 = vadd.f32 %v1002, 1.0
    %v1007 = vadd.f32 %v1003, 1.0
    %v1008 = vmul.f32 %v976, %v1004
    %v1009 = vmul.f32 %v977, %v1005
    %v1010 = vmul.f32 %v978, %v1006
    %v1011 = vmul.f32 %v979, %v1007
    %v1012 = vpack.c.bf16 %v1010, %v1008
    %v1013 = vpack.c.bf16 %v1011, %v1009
    %v1014 = vld [vmem:[#allocation6] sm:$0xff]
    %v1015 = vld [vmem:[#allocation6 + $0x8] sm:$0xff]
    %v1016 = vld [vmem:[#allocation6 + $0x10] sm:$0xff]
    %v1017 = vld [vmem:[#allocation6 + $0x18] sm:$0xff]
    %v1018 = vld [vmem:[#allocation6 + $0x20] sm:$0xff]
    %v1019 = vld [vmem:[#allocation6 + $0x28] sm:$0xff]
    %v1020 = vld [vmem:[#allocation6 + $0x30] sm:$0xff]
    %v1021 = vld [vmem:[#allocation6 + $0x38] sm:$0xff]
    %v1022 = vld [vmem:[#allocation6 + $0x40] sm:$0xff]
    %v1023 = vld [vmem:[#allocation6 + $0x48] sm:$0xff]
    %v1024 = vld [vmem:[#allocation6 + $0x50] sm:$0xff]
    %v1025 = vld [vmem:[#allocation6 + $0x58] sm:$0xff]
    %v1026 = vld [vmem:[#allocation6 + $0x60] sm:$0xff]
    %v1027 = vld [vmem:[#allocation6 + $0x68] sm:$0xff]
    %v1028 = vld [vmem:[#allocation6 + $0x70] sm:$0xff]
    %v1029 = vld [vmem:[#allocation6 + $0x78] sm:$0xff]
    %v1030 = vld [vmem:[#allocation6 + $0x80] sm:$0xff]
    %v1031 = vld [vmem:[#allocation6 + $0x88] sm:$0xff]
    %v1032 = vld [vmem:[#allocation6 + $0x90] sm:$0xff]
    %v1033 = vld [vmem:[#allocation6 + $0x98] sm:$0xff]
    %v1034 = vld [vmem:[#allocation6 + $0xa0] sm:$0xff]
    %v1035 = vld [vmem:[#allocation6 + $0xa8] sm:$0xff]
    %v1036 = vld [vmem:[#allocation6 + $0xb0] sm:$0xff]
    %v1037 = vld [vmem:[#allocation6 + $0xb8] sm:$0xff]
    %v1038 = vld [vmem:[#allocation6 + $0xc0] sm:$0xff]
    %v1039 = vld [vmem:[#allocation6 + $0xc8] sm:$0xff]
    %v1040 = vld [vmem:[#allocation6 + $0xd0] sm:$0xff]
    %v1041 = vld [vmem:[#allocation6 + $0xd8] sm:$0xff]
    %v1042 = vld [vmem:[#allocation6 + $0xe0] sm:$0xff]
    %v1043 = vld [vmem:[#allocation6 + $0xe8] sm:$0xff]
    %v1044 = vld [vmem:[#allocation6 + $0xf0] sm:$0xff]
    %v1045 = vld [vmem:[#allocation6 + $0xf8] sm:$0xff]
    %v1046 = vld [vmem:[%s13] sm:$0x3]
    %v1048 = vlaneseq
    %v1049 = vshrl.u32 %v1048, 7
    %v1050 = vsub.s32 0, %v1049
    %v1051 = vrot.slane %v1046, %v1050
    %v1052 = vlaneseq
    %v1053 = vshrl.u32 %v1052, 7
    %v1054 = vsub.s32 1, %v1053
    %v1055 = vrot.slane %v1046, %v1054
    %v1090 = vunpack.c.l.b16 %v1014
    %v1091 = vunpack.c.h.b16 %v1014
    %v1092 = vunpack.c.l.b16 %v1015
    %v1093 = vunpack.c.h.b16 %v1015
    %v1094 = vunpack.c.l.b16 %v1016
    %v1095 = vunpack.c.h.b16 %v1016
    %v1096 = vunpack.c.l.b16 %v1017
    %v1097 = vunpack.c.h.b16 %v1017
    %v1098 = vunpack.c.l.b16 %v1018
    %v1099 = vunpack.c.h.b16 %v1018
    %v1100 = vunpack.c.l.b16 %v1019
    %v1101 = vunpack.c.h.b16 %v1019
    %v1102 = vunpack.c.l.b16 %v1020
    %v1103 = vunpack.c.h.b16 %v1020
    %v1104 = vunpack.c.l.b16 %v1021
    %v1105 = vunpack.c.h.b16 %v1021
    %v1106 = vunpack.c.l.b16 %v1022
    %v1107 = vunpack.c.h.b16 %v1022
    %v1108 = vunpack.c.l.b16 %v1023
    %v1109 = vunpack.c.h.b16 %v1023
    %v1110 = vunpack.c.l.b16 %v1024
    %v1111 = vunpack.c.h.b16 %v1024
    %v1112 = vunpack.c.l.b16 %v1025
    %v1113 = vunpack.c.h.b16 %v1025
    %v1114 = vunpack.c.l.b16 %v1026
    %v1115 = vunpack.c.h.b16 %v1026
    %v1116 = vunpack.c.l.b16 %v1027
    %v1117 = vunpack.c.h.b16 %v1027
    %v1118 = vunpack.c.l.b16 %v1028
    %v1119 = vunpack.c.h.b16 %v1028
    %v1120 = vunpack.c.l.b16 %v1029
    %v1121 = vunpack.c.h.b16 %v1029
    %v1122 = vunpack.c.l.b16 %v1030
    %v1123 = vunpack.c.h.b16 %v1030
    %v1124 = vunpack.c.l.b16 %v1031
    %v1125 = vunpack.c.h.b16 %v1031
    %v1126 = vunpack.c.l.b16 %v1032
    %v1127 = vunpack.c.h.b16 %v1032
    %v1128 = vunpack.c.l.b16 %v1033
    %v1129 = vunpack.c.h.b16 %v1033
    %v1130 = vunpack.c.l.b16 %v1034
    %v1131 = vunpack.c.h.b16 %v1034
    %v1132 = vunpack.c.l.b16 %v1035
    %v1133 = vunpack.c.h.b16 %v1035
    %v1134 = vunpack.c.l.b16 %v1036
    %v1135 = vunpack.c.h.b16 %v1036
    %v1136 = vunpack.c.l.b16 %v1037
    %v1137 = vunpack.c.h.b16 %v1037
    %v1138 = vunpack.c.l.b16 %v1038
    %v1139 = vunpack.c.h.b16 %v1038
    %v1140 = vunpack.c.l.b16 %v1039
    %v1141 = vunpack.c.h.b16 %v1039
    %v1142 = vunpack.c.l.b16 %v1040
    %v1143 = vunpack.c.h.b16 %v1040
    %v1144 = vunpack.c.l.b16 %v1041
    %v1145 = vunpack.c.h.b16 %v1041
    %v1146 = vunpack.c.l.b16 %v1042
    %v1147 = vunpack.c.h.b16 %v1042
    %v1148 = vunpack.c.l.b16 %v1043
    %v1149 = vunpack.c.h.b16 %v1043
    %v1150 = vunpack.c.l.b16 %v1044
    %v1151 = vunpack.c.h.b16 %v1044
    %v1152 = vunpack.c.l.b16 %v1045
    %v1153 = vunpack.c.h.b16 %v1045
    %v1154 = vpack.c.b16 %v1092, %v1090
    %v1155 = vpack.c.b16 %v1093, %v1091
    %v1156 = vpack.c.b16 %v1096, %v1094
    %v1157 = vpack.c.b16 %v1097, %v1095
    %v1158 = vpack.c.b16 %v1100, %v1098
    %v1159 = vpack.c.b16 %v1101, %v1099
    %v1160 = vpack.c.b16 %v1104, %v1102
    %v1161 = vpack.c.b16 %v1105, %v1103
    %v1162 = vpack.c.b16 %v1108, %v1106
    %v1163 = vpack.c.b16 %v1109, %v1107
    %v1164 = vpack.c.b16 %v1112, %v1110
    %v1165 = vpack.c.b16 %v1113, %v1111
    %v1166 = vpack.c.b16 %v1116, %v1114
    %v1167 = vpack.c.b16 %v1117, %v1115
    %v1168 = vpack.c.b16 %v1120, %v1118
    %v1169 = vpack.c.b16 %v1121, %v1119
    %v1170 = vpack.c.b16 %v1124, %v1122
    %v1171 = vpack.c.b16 %v1125, %v1123
    %v1172 = vpack.c.b16 %v1128, %v1126
    %v1173 = vpack.c.b16 %v1129, %v1127
    %v1174 = vpack.c.b16 %v1132, %v1130
    %v1175 = vpack.c.b16 %v1133, %v1131
    %v1176 = vpack.c.b16 %v1136, %v1134
    %v1177 = vpack.c.b16 %v1137, %v1135
    %v1178 = vpack.c.b16 %v1140, %v1138
    %v1179 = vpack.c.b16 %v1141, %v1139
    %v1180 = vpack.c.b16 %v1144, %v1142
    %v1181 = vpack.c.b16 %v1145, %v1143
    %v1182 = vpack.c.b16 %v1148, %v1146
    %v1183 = vpack.c.b16 %v1149, %v1147
    %v1184 = vpack.c.b16 %v1152, %v1150
    %v1185 = vpack.c.b16 %v1153, %v1151
    %1218 = vmatprep.subr.bf16.mxu0 %v1155
    %1219 = vmatpush1.bf16.msra.mxu0 %v1154
    %1220 = vmatprep.subr.bf16.mxu0 %v1157
    %1221 = vmatpush1.bf16.msra.mxu0 %v1156
    %1222 = vmatprep.subr.bf16.mxu0 %v1159
    %1223 = vmatpush1.bf16.msra.mxu0 %v1158
    %1224 = vmatprep.subr.bf16.mxu0 %v1161
    %1225 = vmatpush1.bf16.msra.mxu0 %v1160
    %1226 = vmatprep.subr.bf16.mxu0 %v1163
    %1227 = vmatpush1.bf16.msra.mxu0 %v1162
    %1228 = vmatprep.subr.bf16.mxu0 %v1165
    %1229 = vmatpush1.bf16.msra.mxu0 %v1164
    %1230 = vmatprep.subr.bf16.mxu0 %v1167
    %1231 = vmatpush1.bf16.msra.mxu0 %v1166
    %1232 = vmatprep.subr.bf16.mxu0 %v1169
    %1233 = vmatpush1.bf16.msra.mxu0 %v1168
    %1234 = vmatprep.subr.bf16.mxu0 %v1171
    %1235 = vmatpush1.bf16.msra.mxu0 %v1170
    %1236 = vmatprep.subr.bf16.mxu0 %v1173
    %1237 = vmatpush1.bf16.msra.mxu0 %v1172
    %1238 = vmatprep.subr.bf16.mxu0 %v1175
    %1239 = vmatpush1.bf16.msra.mxu0 %v1174
    %1240 = vmatprep.subr.bf16.mxu0 %v1177
    %1241 = vmatpush1.bf16.msra.mxu0 %v1176
    %1242 = vmatprep.subr.bf16.mxu0 %v1179
    %1243 = vmatpush1.bf16.msra.mxu0 %v1178
    %1244 = vmatprep.subr.bf16.mxu0 %v1181
    %1245 = vmatpush1.bf16.msra.mxu0 %v1180
    %1246 = vmatprep.subr.bf16.mxu0 %v1183
    %1247 = vmatpush1.bf16.msra.mxu0 %v1182
    %1248 = vmatprep.subr.bf16.mxu0 %v1185
    %1249 = vmatpush1.bf16.msra.mxu0 %v1184
    %1250 = vmatprep.mubr.bf16.mxu0 %v1013
    %1251 = vmatmul.mubr.bf16.gmra.mrb[0].mxu0 %v1012
    %v1252 = vpop.f32.mrb[0].mxu0
    %v1253 = vadd.f32 %v1051, %v1252
    %v1254 = vpop.f32.mrb[0].mxu0
    %v1255 = vadd.f32 %v1055, %v1254
    %v1256 = vpop.f32.mrb[0].mxu0
    %v1257 = vadd.f32 %v1051, %v1256
    %v1258 = vpop.f32.mrb[0].mxu0
    %v1259 = vadd.f32 %v1055, %v1258
    %1260 = vdwg.mxu0
    %v1261 = vmul.f32 %v1253, 0.5
    %v1262 = vmul.f32 %v1255, 0.5
    %v1263 = vmul.f32 %v1257, 0.5
    %v1264 = vmul.f32 %v1259, 0.5
    %v1265 = vmul.f32 %v1253, 0.044715
    %v1266 = vmul.f32 %v1255, 0.044715
    %v1267 = vmul.f32 %v1257, 0.044715
    %v1268 = vmul.f32 %v1259, 0.044715
    %v1269 = vmul.f32 %v1265, %v1253
    %v1270 = vmul.f32 %v1266, %v1255
    %v1271 = vmul.f32 %v1267, %v1257
    %v1272 = vmul.f32 %v1268, %v1259
    %v1273 = vmul.f32 %v1269, %v1253
    %v1274 = vmul.f32 %v1270, %v1255
    %v1275 = vmul.f32 %v1271, %v1257
    %v1276 = vmul.f32 %v1272, %v1259
    %v1277 = vadd.f32 %v1253, %v1273
    %v1278 = vadd.f32 %v1255, %v1274
    %v1279 = vadd.f32 %v1257, %v1275
    %v1280 = vadd.f32 %v1259, %v1276
    %v1281 = vmul.f32 %v1277, 0.7978846
    %v1282 = vmul.f32 %v1278, 0.7978846
    %v1283 = vmul.f32 %v1279, 0.7978846
    %v1284 = vmul.f32 %v1280, 0.7978846
    %v1285 = vtanh.pop %v1281
    %v1286 = vtanh.pop %v1282
    %v1287 = vtanh.pop %v1283
    %v1288 = vtanh.pop %v1284
    %v1289 = vadd.f32 %v1285, 1.0
    %v1290 = vadd.f32 %v1286, 1.0
    %v1291 = vadd.f32 %v1287, 1.0
    %v1292 = vadd.f32 %v1288, 1.0
    %v1293 = vmul.f32 %v1261, %v1289
    %v1294 = vmul.f32 %v1262, %v1290
    %v1295 = vmul.f32 %v1263, %v1291
    %v1296 = vmul.f32 %v1264, %v1292
    %v1297 = vpack.c.bf16 %v1295, %v1293
    %v1298 = vpack.c.bf16 %v1296, %v1294
    %v1299 = vld [vmem:[%s14] sm:$0xf]
    %v1300 = vld [vmem:[%s14 + $0x4] sm:$0xf]
    %v1301 = vld [vmem:[%s14 + $0x8] sm:$0xf]
    %v1302 = vld [vmem:[%s14 + $0xc] sm:$0xf]
    %v1303 = vld [vmem:[%s14 + $0x10] sm:$0xf]
    %v1304 = vld [vmem:[%s14 + $0x14] sm:$0xf]
    %v1305 = vld [vmem:[%s14 + $0x18] sm:$0xf]
    %v1306 = vld [vmem:[%s14 + $0x1c] sm:$0xf]
    %v1307 = vld [vmem:[%s14 + $0x20] sm:$0xf]
    %v1308 = vld [vmem:[%s14 + $0x24] sm:$0xf]
    %v1309 = vld [vmem:[%s14 + $0x28] sm:$0xf]
    %v1310 = vld [vmem:[%s14 + $0x2c] sm:$0xf]
    %v1311 = vld [vmem:[%s14 + $0x30] sm:$0xf]
    %v1312 = vld [vmem:[%s14 + $0x34] sm:$0xf]
    %v1313 = vld [vmem:[%s14 + $0x38] sm:$0xf]
    %v1314 = vld [vmem:[%s14 + $0x3c] sm:$0xf]
    %v1315 = vld [vmem:[%s14 + $0x40] sm:$0xf]
    %v1316 = vld [vmem:[%s14 + $0x44] sm:$0xf]
    %v1317 = vld [vmem:[%s14 + $0x48] sm:$0xf]
    %v1318 = vld [vmem:[%s14 + $0x4c] sm:$0xf]
    %v1319 = vld [vmem:[%s14 + $0x50] sm:$0xf]
    %v1320 = vld [vmem:[%s14 + $0x54] sm:$0xf]
    %v1321 = vld [vmem:[%s14 + $0x58] sm:$0xf]
    %v1322 = vld [vmem:[%s14 + $0x5c] sm:$0xf]
    %v1323 = vld [vmem:[%s14 + $0x60] sm:$0xf]
    %v1324 = vld [vmem:[%s14 + $0x64] sm:$0xf]
    %v1325 = vld [vmem:[%s14 + $0x68] sm:$0xf]
    %v1326 = vld [vmem:[%s14 + $0x6c] sm:$0xf]
    %v1327 = vld [vmem:[%s14 + $0x70] sm:$0xf]
    %v1328 = vld [vmem:[%s14 + $0x74] sm:$0xf]
    %v1329 = vld [vmem:[%s14 + $0x78] sm:$0xf]
    %v1330 = vld [vmem:[%s14 + $0x7c] sm:$0xf]
    %v1331 = vld [vmem:[%s15] sm:$0x1]
    %v1333 = vlaneseq
    %v1334 = vshrl.u32 %v1333, 7
    %v1335 = vsub.s32 0, %v1334
    %v1336 = vrot.slane %v1331, %v1335
    %v1370 = vunpack.c.l.b16 %v1299
    %v1371 = vunpack.c.l.b16 %v1300
    %v1372 = vunpack.c.l.b16 %v1301
    %v1373 = vunpack.c.l.b16 %v1302
    %v1374 = vunpack.c.l.b16 %v1303
    %v1375 = vunpack.c.l.b16 %v1304
    %v1376 = vunpack.c.l.b16 %v1305
    %v1377 = vunpack.c.l.b16 %v1306
    %v1378 = vunpack.c.l.b16 %v1307
    %v1379 = vunpack.c.l.b16 %v1308
    %v1380 = vunpack.c.l.b16 %v1309
    %v1381 = vunpack.c.l.b16 %v1310
    %v1382 = vunpack.c.l.b16 %v1311
    %v1383 = vunpack.c.l.b16 %v1312
    %v1384 = vunpack.c.l.b16 %v1313
    %v1385 = vunpack.c.l.b16 %v1314
    %v1386 = vunpack.c.l.b16 %v1315
    %v1387 = vunpack.c.l.b16 %v1316
    %v1388 = vunpack.c.l.b16 %v1317
    %v1389 = vunpack.c.l.b16 %v1318
    %v1390 = vunpack.c.l.b16 %v1319
    %v1391 = vunpack.c.l.b16 %v1320
    %v1392 = vunpack.c.l.b16 %v1321
    %v1393 = vunpack.c.l.b16 %v1322
    %v1394 = vunpack.c.l.b16 %v1323
    %v1395 = vunpack.c.l.b16 %v1324
    %v1396 = vunpack.c.l.b16 %v1325
    %v1397 = vunpack.c.l.b16 %v1326
    %v1398 = vunpack.c.l.b16 %v1327
    %v1399 = vunpack.c.l.b16 %v1328
    %v1400 = vunpack.c.l.b16 %v1329
    %v1401 = vunpack.c.l.b16 %v1330
    %v1402 = vpack.c.b16 %v1371, %v1370
    %v1403 = vpack.c.b16 %v1373, %v1372
    %v1404 = vpack.c.b16 %v1375, %v1374
    %v1405 = vpack.c.b16 %v1377, %v1376
    %v1406 = vpack.c.b16 %v1379, %v1378
    %v1407 = vpack.c.b16 %v1381, %v1380
    %v1408 = vpack.c.b16 %v1383, %v1382
    %v1409 = vpack.c.b16 %v1385, %v1384
    %v1410 = vpack.c.b16 %v1387, %v1386
    %v1411 = vpack.c.b16 %v1389, %v1388
    %v1412 = vpack.c.b16 %v1391, %v1390
    %v1413 = vpack.c.b16 %v1393, %v1392
    %v1414 = vpack.c.b16 %v1395, %v1394
    %v1415 = vpack.c.b16 %v1397, %v1396
    %v1416 = vpack.c.b16 %v1399, %v1398
    %v1417 = vpack.c.b16 %v1401, %v1400
    %1434 = vmatprep.subr.bf16.mxu0 0
    %1435 = vmatpush1.bf16.msra.mxu0 %v1402
    %1436 = vmatprep.subr.bf16.mxu0 0
    %1437 = vmatpush1.bf16.msra.mxu0 %v1403
    %1438 = vmatprep.subr.bf16.mxu0 0
    %1439 = vmatpush1.bf16.msra.mxu0 %v1404
    %1440 = vmatprep.subr.bf16.mxu0 0
    %1441 = vmatpush1.bf16.msra.mxu0 %v1405
    %1442 = vmatprep.subr.bf16.mxu0 0
    %1443 = vmatpush1.bf16.msra.mxu0 %v1406
    %1444 = vmatprep.subr.bf16.mxu0 0
    %1445 = vmatpush1.bf16.msra.mxu0 %v1407
    %1446 = vmatprep.subr.bf16.mxu0 0
    %1447 = vmatpush1.bf16.msra.mxu0 %v1408
    %1448 = vmatprep.subr.bf16.mxu0 0
    %1449 = vmatpush1.bf16.msra.mxu0 %v1409
    %1450 = vmatprep.subr.bf16.mxu0 0
    %1451 = vmatpush1.bf16.msra.mxu0 %v1410
    %1452 = vmatprep.subr.bf16.mxu0 0
    %1453 = vmatpush1.bf16.msra.mxu0 %v1411
    %1454 = vmatprep.subr.bf16.mxu0 0
    %1455 = vmatpush1.bf16.msra.mxu0 %v1412
    %1456 = vmatprep.subr.bf16.mxu0 0
    %1457 = vmatpush1.bf16.msra.mxu0 %v1413
    %1458 = vmatprep.subr.bf16.mxu0 0
    %1459 = vmatpush1.bf16.msra.mxu0 %v1414
    %1460 = vmatprep.subr.bf16.mxu0 0
    %1461 = vmatpush1.bf16.msra.mxu0 %v1415
    %1462 = vmatprep.subr.bf16.mxu0 0
    %1463 = vmatpush1.bf16.msra.mxu0 %v1416
    %1464 = vmatprep.subr.bf16.mxu0 0
    %1465 = vmatpush1.bf16.msra.mxu0 %v1417
    %1466 = vmatprep.mubr.bf16.mxu0 %v1298
    %1467 = vmatmul.mubr.bf16.gmra.mrb[0].mxu0 %v1297
    %v1468 = vpop.f32.mrb[0].mxu0
    %v1469 = vadd.f32 %v1336, %v1468
    %v1470 = vpop.f32.mrb[0].mxu0
    %v1471 = vpop.f32.mrb[0].mxu0
    %v1472 = vadd.f32 %v1336, %v1471
    %v1473 = vpop.f32.mrb[0].mxu0
    %1474 = vdwg.mxu0
    %vm1475 = vcmask 23552
    %1476 = vst.msk [vmem:[%s16] sm:$0xff] %vm1475, %v1469
    %1477 = vst.msk [vmem:[%s16 + $0x8] sm:$0xff] %vm1475, %v1472
    // Predicated region
    $region78: #{tpu_custom_call.1} parent=1 // pred_check
      _
    $region79: #{tpu_custom_call.1} parent=1 // pred_check_branch
      %1479 = sbr.rel (0) target = $region81
    $region80: #{tpu_custom_call.1} parent=1 // pred_region
      _
    $region81: #{tpu_custom_call.1} parent=1 // pred_fallthru
      _
    // Predicated region
    $region82: #{tpu_custom_call.1} parent=1 // pred_check
      _
    $region83: #{tpu_custom_call.1} parent=1 // pred_check_branch
      %1481 = sbr.rel (0) target = $region85
    $region84: #{tpu_custom_call.1} parent=1 // pred_region
      _
    $region85: #{tpu_custom_call.1} parent=1 // pred_fallthru
      _
    %1482 = vsyncpa [#allocation3], 1
    %1483 = vsyncpa [#allocation5], 1

</llo_original>
